<compile_context>
chip_gen: v6e
topology: v6e:2x2x1
jax: 0.10.0
libtpu: 0.0.40
codegen_flags: <defaults>
</compile_context>

<pallas_src>
import jax
import jax.numpy as jnp
from jax.experimental import pallas as pl
from jax.experimental.pallas import tpu as pltpu


# Per-grid-step HBM traffic target (amortizes ~0.35 us per-step overhead).
_TARGET_STEP_BYTES = 4 << 20
# Flipped to False if this jax build rejects single-buffered BlockSpecs.
_SINGLE_BUFFER_OK = True


def _round_up(x, m):
    return ((x + m - 1) // m) * m


def _round_down(x, m):
    return (x // m) * m


def _chip_info():
    """Returns (per-core VMEM bytes, #TensorCores sharing 'parallel' axes)."""
    vmem_cap = 128 << 20
    try:
        info = pltpu.get_tpu_info()
        vmem_cap = int(getattr(info, "vmem_capacity_bytes", vmem_cap))
    except Exception:
        pass
    # Heuristic: the 64 MiB-VMEM generation (v7x) has 2 TensorCores per chip;
    # v5e/v6e have 128 MiB and a single TC (grid = sequential loop there).
    num_tc = 2 if vmem_cap <= (64 << 20) else 1
    return vmem_cap, num_tc


def _make_fused_kernel(scale_pre, activation):
    """Single-pass kernel (W fully resident in VMEM), grid = (row_tiles,)."""

    def kernel(h_ref, norm_ref, w_ref, b_ref, o_ref):
        x = h_ref[...]
        if scale_pre:
            x = x * norm_ref[...]                            # [tn, in] * [tn, 1]
        y = jnp.dot(x, w_ref[...], preferred_element_type=jnp.float32)
        if not scale_pre:
            y = y * norm_ref[...]                            # [tn, out] * [tn, 1]
        y = y + b_ref[...]                                   # + [1, out]
        if activation is not None:
            y = activation(y)
        o_ref[...] = y.astype(o_ref.dtype)

    return kernel


def _make_ktiled_kernel(scale_pre, activation):
    """K-tiled kernel with f32 accumulator, grid = (row_tiles, k_tiles)."""

    def kernel(h_ref, norm_ref, w_ref, b_ref, o_ref, acc_ref):
        k = pl.program_id(1)

        @pl.when(k == 0)
        def _init():
            acc_ref[...] = jnp.zeros_like(acc_ref)

        x = h_ref[...]
        if scale_pre:
            x = x * norm_ref[...]
        acc_ref[...] += jnp.dot(x, w_ref[...], preferred_element_type=jnp.float32)

        @pl.when(k == pl.num_programs(1) - 1)
        def _finalize():
            y = acc_ref[...]
            if not scale_pre:
                y = y * norm_ref[...]
            y = y + b_ref[...]
            if activation is not None:
                y = activation(y)
            o_ref[...] = y.astype(o_ref.dtype)

    return kernel


def node_apply(h, norm, weight, bias, *, activation=jax.nn.relu,
               tile_n=None, tile_k=None):
    """GCN NodeApplyModule forward: activation((h * norm) @ W + b).

    h: [N, in_feats], norm: [N] or [N, 1], weight: [in_feats, out_feats],
    bias: [out_feats].  Returns [N, out_feats] in h.dtype.
    """
    global _SINGLE_BUFFER_OK

    N, in_feats = h.shape
    out_feats = weight.shape[1]
    norm = norm.reshape(N, 1).astype(h.dtype)
    bias2d = bias.reshape(1, out_feats)

    itemsize = jnp.dtype(h.dtype).itemsize
    w_itemsize = jnp.dtype(weight.dtype).itemsize
    # Sublane packing: 8 rows/vreg for 32-bit, 16 for bf16, 32 for int8/fp8.
    sub = max(8, 32 // max(itemsize, 1))

    vmem_cap, num_tc = _chip_info()
    vmem_budget = (vmem_cap * 3) // 4          # headroom for compiler scratch

    # ---- resident-W vs K-tiled decision ------------------------------------
    w_bytes_db = 2 * in_feats * out_feats * w_itemsize   # double-buffered W
    k_tiled = (tile_k is not None) or (w_bytes_db > vmem_budget // 3)

    if k_tiled:
        if tile_k is not None:
            tk = _round_up(max(int(tile_k), 128), 128)
        else:
            # Biggest K tile whose double-buffered W slab fits in ~1/3 of VMEM.
            tk = _round_down(
                (vmem_budget // 3) // max(2 * out_feats * w_itemsize, 1), 128)
            tk = max(128, tk)
        tk = min(tk, _round_up(in_feats, 128))
        k_pad = _round_up(in_feats, tk)
        grid_k = k_pad // tk
        k_cols = tk
        per_row_vmem = 2 * (tk + 1 + out_feats) * itemsize + out_feats * 4
        w_resident = 2 * tk * out_feats * w_itemsize + 2 * out_feats * w_itemsize
    else:
        k_pad = in_feats
        grid_k = 1
        k_cols = in_feats
        per_row_vmem = 2 * (in_feats + 1 + out_feats) * itemsize
        w_resident = w_bytes_db + 2 * out_feats * w_itemsize

    # ---- row-tile size ------------------------------------------------------
    if tile_n is not None:
        tn = _round_up(max(int(tile_n), sub), sub)
    else:
        bytes_per_row = (k_cols + out_feats + 1) * itemsize
        tn = _round_up(pl.cdiv(_TARGET_STEP_BYTES, bytes_per_row), sub)
    tn = min(tn, _round_up(N, sub))                  # no bigger than the data
    room = max(vmem_budget - w_resident, per_row_vmem * sub)
    tn = min(tn, max(sub, _round_down(room // per_row_vmem, sub)))
    # TODO(synk): if even tn == sub overflows VMEM (huge out_feats), tile the
    # out_feats dim as well instead of relying on the scoped-VMEM cap.

    # Megacore balance: only multi-TC chips (v7x) shard the 'parallel' axis;
    # keep grid_n a multiple of the TC count so no core sits idle.
    if num_tc > 1 and N > sub:
        steps = _round_up(pl.cdiv(N, tn), num_tc)
        tn = min(tn, _round_up(pl.cdiv(N, steps), sub))

    grid_n = pl.cdiv(N, tn)
    n_pad = grid_n * tn

    # ---- padding (zero rows -> activation(bias), sliced off; zero K cols) ---
    if n_pad != N:
        h = jnp.pad(h, ((0, n_pad - N), (0, 0)))
        norm = jnp.pad(norm, ((0, n_pad - N), (0, 0)))
    if k_tiled and k_pad != in_feats:
        h = jnp.pad(h, ((0, 0), (0, k_pad - in_feats)))
        weight = jnp.pad(weight, ((0, k_pad - in_feats), (0, 0)))

    # Norm is per-row: (h*norm)@W == (h@W)*norm -> scale the narrower side.
    scale_pre = out_feats >= in_feats

    footprint = w_resident + tn * per_row_vmem
    vmem_limit = int(min(max(footprint * 3 // 2 + (1 << 20), 16 << 20),
                         vmem_budget))

    cost = pl.CostEstimate(
        flops=2 * n_pad * in_feats * out_feats          # matmul
        + n_pad * min(in_feats, out_feats)              # norm scale
        + 2 * n_pad * out_feats,                        # bias + activation
        transcendentals=0,
        bytes_accessed=(n_pad * k_pad + n_pad) * itemsize
        + (k_pad * out_feats + out_feats) * w_itemsize
        + n_pad * out_feats * itemsize,
    )

    def call_fused(single_buffer_const):
        # Constant-index blocks (W, bias) never change -> single buffer saves
        # half the resident-W VMEM; double-buffering them buys nothing.
        const_kwargs = (dict(pipeline_mode=pl.Buffered(1))
                        if single_buffer_const else {})
        kernel = _make_fused_kernel(scale_pre, activation)
        return pl.pallas_call(
            kernel,
            out_shape=jax.ShapeDtypeStruct((n_pad, out_feats), h.dtype),
            grid_spec=pltpu.PrefetchScalarGridSpec(
                num_scalar_prefetch=0,
                grid=(grid_n,),
                in_specs=[
                    pl.BlockSpec((tn, in_feats), lambda i: (i, 0)),        # h
                    pl.BlockSpec((tn, 1), lambda i: (i, 0)),               # norm
                    pl.BlockSpec((in_feats, out_feats), lambda i: (0, 0),  # W
                                 **const_kwargs),
                    pl.BlockSpec((1, out_feats), lambda i: (0, 0),         # bias
                                 **const_kwargs),
                ],
                out_specs=pl.BlockSpec((tn, out_feats), lambda i: (i, 0)),
            ),
            compiler_params=pltpu.CompilerParams(
                dimension_semantics=("parallel",),
                vmem_limit_bytes=vmem_limit,
            ),
            cost_estimate=cost,
        )(h, norm, weight, bias2d)

    def call_ktiled():
        kernel = _make_ktiled_kernel(scale_pre, activation)
        return pl.pallas_call(
            kernel,
            out_shape=jax.ShapeDtypeStruct((n_pad, out_feats), h.dtype),
            grid_spec=pltpu.PrefetchScalarGridSpec(
                num_scalar_prefetch=0,
                grid=(grid_n, grid_k),
                in_specs=[
                    pl.BlockSpec((tn, tk), lambda i, k: (i, k)),           # h
                    pl.BlockSpec((tn, 1), lambda i, k: (i, 0)),            # norm
                    pl.BlockSpec((tk, out_feats), lambda i, k: (k, 0)),    # W
                    pl.BlockSpec((1, out_feats), lambda i, k: (0, 0)),     # bias
                ],
                out_specs=pl.BlockSpec((tn, out_feats), lambda i, k: (i, 0)),
                scratch_shapes=[pltpu.VMEM((tn, out_feats), jnp.float32)],
            ),
            compiler_params=pltpu.CompilerParams(
                dimension_semantics=("parallel", "arbitrary"),
                vmem_limit_bytes=vmem_limit,
            ),
            cost_estimate=cost,
        )(h, norm, weight, bias2d)

    if k_tiled:
        out = call_ktiled()
    elif _SINGLE_BUFFER_OK:
        try:
            out = call_fused(True)
        except Exception:
            _SINGLE_BUFFER_OK = False
            out = call_fused(False)
    else:
        out = call_fused(False)

    return out[:N] if n_pad != N else out


if __name__ == "__main__":
    key = jax.random.PRNGKey(0)

    def make_inputs(k, N, in_feats, out_feats, dtype=jnp.float32):
        k_h, k_n, k_w, k_b = jax.random.split(k, 4)
        hh = jax.random.normal(k_h, (N, in_feats), dtype=dtype)
        nn = jax.random.uniform(k_n, (N, 1), dtype=dtype, minval=0.1, maxval=1.0)
        bound = 1.0 / (in_feats ** 0.5)
        ww = jax.random.uniform(k_w, (in_feats, out_feats), dtype=dtype,
                                minval=-bound, maxval=bound)
        bb = jax.random.uniform(k_b, (out_feats,), dtype=dtype,
                                minval=-bound, maxval=bound)
        return hh, nn, ww, bb

    def ref_fwd(hh, nn, ww, bb, act=True):
        y = (hh * nn) @ ww + bb
        return jnp.maximum(y, 0.0) if act else y

    # 1) Small GCN layer, N not tile-aligned (padded-rows path), ReLU.
    h, norm, w, b = make_inputs(key, 300, 32, 64)
    out = jax.block_until_ready(node_apply(h, norm, w, b))
    assert out.shape == (300, 64)
    assert jnp.allclose(out, ref_fwd(h, norm, w, b), atol=1e-5, rtol=1e-5)

    # 2) Larger N (big-tile / megacore path), no activation (GCN output layer).
    h2, norm2, w2, b2 = make_inputs(jax.random.fold_in(key, 1), 4096, 32, 64)
    out2 = jax.block_until_ready(node_apply(h2, norm2, w2, b2, activation=None))
    assert jnp.allclose(out2, ref_fwd(h2, norm2, w2, b2, act=False),
                        atol=1e-5, rtol=1e-5)

    # 3) Forced K-tiled path (f32 accumulator, zero-padded K, post-matmul norm
    #    scaling).  Looser tolerance: post-matmul scaling is algebraically
    #    identical but can differ from the reference at MXU input-rounding
    #    level under default matmul precision.
    h3, norm3, w3, b3 = make_inputs(jax.random.fold_in(key, 2), 192, 200, 64)
    out3 = jax.block_until_ready(node_apply(h3, norm3, w3, b3, tile_k=128))
    assert jnp.allclose(out3, ref_fwd(h3, norm3, w3, b3), atol=2e-2, rtol=2e-2)

    print("KERNEL_OK")
</pallas_src>

<mosaic_0001>
module attributes {stable_mosaic.version = 11 : i64} {
  func.func @kernel(%arg0: i32, %arg1: memref<304x32xf32, #tpu.memory_space<vmem>>, %arg2: memref<304x1xf32, #tpu.memory_space<vmem>>, %arg3: memref<32x64xf32, #tpu.memory_space<vmem>>, %arg4: memref<1x64xf32, #tpu.memory_space<vmem>>, %arg5: memref<304x64xf32, #tpu.memory_space<vmem>>) attributes {dimension_semantics = [#tpu.dimension_semantics<parallel>], iteration_bounds = array<i64: 1>, scalar_prefetch = 0 : i64, scratch_operands = 0 : i64, tpu.core_type = #tpu.core_type<tc>, window_params = [{transform_indices = @transform_0, window_bounds = array<i64: 304, 32>}, {transform_indices = @transform_1, window_bounds = array<i64: 304, 1>}, {pipeline_mode = #tpu.pipeline_mode<synchronous>, transform_indices = @transform_2, window_bounds = array<i64: 32, 64>}, {pipeline_mode = #tpu.pipeline_mode<synchronous>, transform_indices = @transform_3, window_bounds = array<i64: 1, 64>}, {transform_indices = @transform_4, window_bounds = array<i64: 304, 64>}]} {
    %c0 = arith.constant 0 : index
    %c0_0 = arith.constant 0 : index
    %0 = vector.load %arg1[%c0, %c0_0] : memref<304x32xf32, #tpu.memory_space<vmem>>, vector<304x32xf32>
    %c0_1 = arith.constant 0 : index
    %c0_2 = arith.constant 0 : index
    %1 = vector.load %arg2[%c0_1, %c0_2] : memref<304x1xf32, #tpu.memory_space<vmem>>, vector<304x1xf32>
    %2 = vector.broadcast %1 : vector<304x1xf32> to vector<304x32xf32>
    %3 = arith.mulf %0, %2 : vector<304x32xf32>
    %c0_3 = arith.constant 0 : index
    %c0_4 = arith.constant 0 : index
    %4 = vector.load %arg3[%c0_3, %c0_4] : memref<32x64xf32, #tpu.memory_space<vmem>>, vector<32x64xf32>
    %cst = arith.constant dense<0.000000e+00> : vector<304x64xf32>
    %5 = tpu.matmul %3, %4, %cst {dimension_numbers = #tpu.dot_dimension_numbers<[1], [0], [0], [1], [0, 0, 1, 1], [], []>} : vector<304x32xf32>, vector<32x64xf32>, vector<304x64xf32> -> vector<304x64xf32>
    %c0_5 = arith.constant 0 : index
    %c0_6 = arith.constant 0 : index
    %6 = vector.load %arg4[%c0_5, %c0_6] : memref<1x64xf32, #tpu.memory_space<vmem>>, vector<1x64xf32>
    %7 = vector.broadcast %6 : vector<1x64xf32> to vector<304x64xf32>
    %8 = arith.addf %5, %7 : vector<304x64xf32>
    %cst_7 = arith.constant 0.000000e+00 : f32
    %9 = vector.broadcast %cst_7 : f32 to vector<304x64xf32>
    %10 = arith.maximumf %8, %9 : vector<304x64xf32>
    %c0_8 = arith.constant 0 : index
    %c0_9 = arith.constant 0 : index
    %11 = vector.load %arg5[%c0_8, %c0_9] : memref<304x64xf32, #tpu.memory_space<vmem>>, vector<304x64xf32>
    tpu.vector_store %arg5[%c0_8, %c0_9], %10 {strides = array<i32>} : memref<304x64xf32, #tpu.memory_space<vmem>>, vector<304x64xf32>,
    return
  }
  func.func @transform_0(%arg0: i32) -> (i32, i32) {
    %c0_i32 = arith.constant 0 : i32
    %c0_i32_0 = arith.constant 0 : i32
    return %arg0, %c0_i32 : i32, i32
  }
  func.func @transform_1(%arg0: i32) -> (i32, i32) {
    %c0_i32 = arith.constant 0 : i32
    %c0_i32_0 = arith.constant 0 : i32
    return %arg0, %c0_i32 : i32, i32
  }
  func.func @transform_2(%arg0: i32) -> (i32, i32) {
    %c0_i32 = arith.constant 0 : i32
    %c0_i32_0 = arith.constant 0 : i32
    %c0_i32_1 = arith.constant 0 : i32
    return %c0_i32, %c0_i32_0 : i32, i32
  }
  func.func @transform_3(%arg0: i32) -> (i32, i32) {
    %c0_i32 = arith.constant 0 : i32
    %c0_i32_0 = arith.constant 0 : i32
    %c0_i32_1 = arith.constant 0 : i32
    return %c0_i32, %c0_i32_0 : i32, i32
  }
  func.func @transform_4(%arg0: i32) -> (i32, i32) {
    %c0_i32 = arith.constant 0 : i32
    %c0_i32_0 = arith.constant 0 : i32
    return %arg0, %c0_i32 : i32, i32
  }
}

module attributes {stable_mosaic.version = 11 : i64} {
  func.func @kernel(%arg0: i32, %arg1: memref<304x32xf32, #tpu.memory_space<vmem>>, %arg2: memref<304x1xf32, #tpu.memory_space<vmem>>, %arg3: memref<32x64xf32, #tpu.memory_space<vmem>>, %arg4: memref<1x64xf32, #tpu.memory_space<vmem>>, %arg5: memref<304x64xf32, #tpu.memory_space<vmem>>) attributes {dimension_semantics = [#tpu.dimension_semantics<parallel>], iteration_bounds = array<i64: 1>, scalar_prefetch = 0 : i64, scratch_operands = 0 : i64, tpu.core_type = #tpu.core_type<tc>, window_params = [{transform_indices = @transform_0, window_bounds = array<i64: 304, 32>}, {transform_indices = @transform_1, window_bounds = array<i64: 304, 1>}, {pipeline_mode = #tpu.pipeline_mode<synchronous>, transform_indices = @transform_2, window_bounds = array<i64: 32, 64>}, {pipeline_mode = #tpu.pipeline_mode<synchronous>, transform_indices = @transform_3, window_bounds = array<i64: 1, 64>}, {transform_indices = @transform_4, window_bounds = array<i64: 304, 64>}]} {
    %c0 = arith.constant 0 : index
    %c0_0 = arith.constant 0 : index
    %0 = vector.load %arg1[%c0, %c0_0] : memref<304x32xf32, #tpu.memory_space<vmem>>, vector<304x32xf32>
    %c0_1 = arith.constant 0 : index
    %c0_2 = arith.constant 0 : index
    %1 = vector.load %arg2[%c0_1, %c0_2] : memref<304x1xf32, #tpu.memory_space<vmem>>, vector<304x1xf32>
    %2 = vector.broadcast %1 : vector<304x1xf32> to vector<304x32xf32>
    %3 = arith.mulf %0, %2 : vector<304x32xf32>
    %c0_3 = arith.constant 0 : index
    %c0_4 = arith.constant 0 : index
    %4 = vector.load %arg3[%c0_3, %c0_4] : memref<32x64xf32, #tpu.memory_space<vmem>>, vector<32x64xf32>
    %cst = arith.constant dense<0.000000e+00> : vector<304x64xf32>
    %5 = tpu.matmul %3, %4, %cst {dimension_numbers = #tpu.dot_dimension_numbers<[1], [0], [0], [1], [0, 0, 1, 1], [], []>} : vector<304x32xf32>, vector<32x64xf32>, vector<304x64xf32> -> vector<304x64xf32>
    %c0_5 = arith.constant 0 : index
    %c0_6 = arith.constant 0 : index
    %6 = vector.load %arg4[%c0_5, %c0_6] : memref<1x64xf32, #tpu.memory_space<vmem>>, vector<1x64xf32>
    %7 = vector.broadcast %6 : vector<1x64xf32> to vector<304x64xf32>
    %8 = arith.addf %5, %7 : vector<304x64xf32>
    %cst_7 = arith.constant 0.000000e+00 : f32
    %9 = vector.broadcast %cst_7 : f32 to vector<304x64xf32>
    %10 = arith.maximumf %8, %9 : vector<304x64xf32>
    %c0_8 = arith.constant 0 : index
    %c0_9 = arith.constant 0 : index
    %11 = vector.load %arg5[%c0_8, %c0_9] : memref<304x64xf32, #tpu.memory_space<vmem>>, vector<304x64xf32>
    tpu.vector_store %arg5[%c0_8, %c0_9], %10 {strides = array<i32>} : memref<304x64xf32, #tpu.memory_space<vmem>>, vector<304x64xf32>,
    return
  }
  func.func @transform_0(%arg0: i32) -> (i32, i32) {
    %c0_i32 = arith.constant 0 : i32
    %c0_i32_0 = arith.constant 0 : i32
    return %arg0, %c0_i32 : i32, i32
  }
  func.func @transform_1(%arg0: i32) -> (i32, i32) {
    %c0_i32 = arith.constant 0 : i32
    %c0_i32_0 = arith.constant 0 : i32
    return %arg0, %c0_i32 : i32, i32
  }
  func.func @transform_2(%arg0: i32) -> (i32, i32) {
    %c0_i32 = arith.constant 0 : i32
    %c0_i32_0 = arith.constant 0 : i32
    %c0_i32_1 = arith.constant 0 : i32
    return %c0_i32, %c0_i32_0 : i32, i32
  }
  func.func @transform_3(%arg0: i32) -> (i32, i32) {
    %c0_i32 = arith.constant 0 : i32
    %c0_i32_0 = arith.constant 0 : i32
    %c0_i32_1 = arith.constant 0 : i32
    return %c0_i32, %c0_i32_0 : i32, i32
  }
  func.func @transform_4(%arg0: i32) -> (i32, i32) {
    %c0_i32 = arith.constant 0 : i32
    %c0_i32_0 = arith.constant 0 : i32
    return %arg0, %c0_i32 : i32, i32
  }
}

</mosaic_0001>

<llo_original>
// kernel: tpu_custom_call.1
$region0: #{tpu_custom_call.1}
  #allocation0 [shape = 'u32[]', space=smem, size = 0x4, offset = 0x4, fixed_abs, tag = 'smem constant byte address 0x4 - core index']
  #allocation1 [shape = 'u32[144,128]{1,0:T(1,128)}', space=vmem, size = 0x12000, scoped, tag = 'internal scratch']
  %s0 = inlined_call_operand.vmem [shape: f32[304,32], index: 0, kind: input, shape index: {}]
  %s1 = inlined_call_operand.vmem [shape: f32[304,1], index: 1, kind: input, shape index: {}]
  %s2 = inlined_call_operand.vmem [shape: f32[32,64], index: 2, kind: input, shape index: {}]
  %s3 = inlined_call_operand.vmem [shape: f32[1,64], index: 3, kind: input, shape index: {}]
  %s4 = inlined_call_operand.vmem [shape: f32[304,64], index: 4, kind: output, shape index: {}]
  %s5 = sld [smem:[#allocation0]]
  $region26: #{tpu_custom_call.1} parent=0
    _
  %s7 = ssub.s32 1, %s5
  %s8 = scalar_select 0, %s7, %s5
  // Predicated region
  $region2: #{tpu_custom_call.1} parent=0 // pred_check
    _
  $region3: #{tpu_custom_call.1} parent=0 // pred_check_branch
    %10 = sbr.rel (0) target = $region5
  $region4: #{tpu_custom_call.1} parent=0 // pred_region
    _
  $region5: #{tpu_custom_call.1} parent=0 // pred_fallthru
    _
  // Predicated region
  $region6: #{tpu_custom_call.1} parent=0 // pred_check
    _
  $region7: #{tpu_custom_call.1} parent=0 // pred_check_branch
    %12 = sbr.rel (0) target = $region9
  $region8: #{tpu_custom_call.1} parent=0 // pred_region
    _
  $region9: #{tpu_custom_call.1} parent=0 // pred_fallthru
    _
  // Predicated region
  $region10: #{tpu_custom_call.1} parent=0 // pred_check
    _
  $region11: #{tpu_custom_call.1} parent=0 // pred_check_branch
    %14 = sbr.rel (0) target = $region13
  $region12: #{tpu_custom_call.1} parent=0 // pred_region
    _
  $region13: #{tpu_custom_call.1} parent=0 // pred_fallthru
    _
  // Predicated region
  $region14: #{tpu_custom_call.1} parent=0 // pred_check
    _
  $region15: #{tpu_custom_call.1} parent=0 // pred_check_branch
    %16 = sbr.rel (0) target = $region17
  $region16: #{tpu_custom_call.1} parent=0 // pred_region
    _
  $region17: #{tpu_custom_call.1} parent=0 // pred_fallthru
    _
  %v17 = vld [vmem:[%s0] sm:$0xff]
  %v18 = vld [vmem:[%s0 + $0x8] sm:$0xff]
  %v19 = vld [vmem:[%s0 + $0x10] sm:$0xff]
  %v20 = vld [vmem:[%s0 + $0x18] sm:$0xff]
  %v21 = vld [vmem:[%s0 + $0x20] sm:$0xff]
  %v22 = vld [vmem:[%s0 + $0x28] sm:$0xff]
  %v23 = vld [vmem:[%s0 + $0x30] sm:$0xff]
  %v24 = vld [vmem:[%s0 + $0x38] sm:$0xff]
  %v25 = vld [vmem:[%s0 + $0x40] sm:$0xff]
  %v26 = vld [vmem:[%s0 + $0x48] sm:$0xff]
  %v27 = vld [vmem:[%s0 + $0x50] sm:$0xff]
  %v28 = vld [vmem:[%s0 + $0x58] sm:$0xff]
  %v29 = vld [vmem:[%s0 + $0x60] sm:$0xff]
  %v30 = vld [vmem:[%s0 + $0x68] sm:$0xff]
  %v31 = vld [vmem:[%s0 + $0x70] sm:$0xff]
  %v32 = vld [vmem:[%s0 + $0x78] sm:$0xff]
  %v33 = vld [vmem:[%s0 + $0x80] sm:$0xff]
  %v34 = vld [vmem:[%s0 + $0x88] sm:$0xff]
  %v35 = vld [vmem:[%s0 + $0x90] sm:$0xff]
  %v36 = vld [vmem:[%s0 + $0x98] sm:$0xff]
  %v37 = vld [vmem:[%s0 + $0xa0] sm:$0xff]
  %v38 = vld [vmem:[%s0 + $0xa8] sm:$0xff]
  %v39 = vld [vmem:[%s0 + $0xb0] sm:$0xff]
  %v40 = vld [vmem:[%s0 + $0xb8] sm:$0xff]
  %v41 = vld [vmem:[%s0 + $0xc0] sm:$0xff]
  %v42 = vld [vmem:[%s0 + $0xc8] sm:$0xff]
  %v43 = vld [vmem:[%s0 + $0xd0] sm:$0xff]
  %v44 = vld [vmem:[%s0 + $0xd8] sm:$0xff]
  %v45 = vld [vmem:[%s0 + $0xe0] sm:$0xff]
  %v46 = vld [vmem:[%s0 + $0xe8] sm:$0xff]
  %v47 = vld [vmem:[%s0 + $0xf0] sm:$0xff]
  %v48 = vld [vmem:[%s0 + $0xf8] sm:$0xff]
  %v49 = vld [vmem:[%s0 + $0x100] sm:$0xff]
  %v50 = vld [vmem:[%s0 + $0x108] sm:$0xff]
  %v51 = vld [vmem:[%s0 + $0x110] sm:$0xff]
  %v52 = vld [vmem:[%s0 + $0x118] sm:$0xff]
  %v53 = vld [vmem:[%s0 + $0x120] sm:$0xff]
  %v54 = vld [vmem:[%s0 + $0x128] sm:$0xff]
  %v55 = vld [vmem:[%s1] sm:$0xff]
  %v56 = vld [vmem:[%s1 + $0x8] sm:$0xff]
  %v57 = vld [vmem:[%s1 + $0x10] sm:$0xff]
  %v58 = vld [vmem:[%s1 + $0x18] sm:$0xff]
  %v59 = vld [vmem:[%s1 + $0x20] sm:$0xff]
  %v60 = vld [vmem:[%s1 + $0x28] sm:$0xff]
  %v61 = vld [vmem:[%s1 + $0x30] sm:$0xff]
  %v62 = vld [vmem:[%s1 + $0x38] sm:$0xff]
  %v63 = vld [vmem:[%s1 + $0x40] sm:$0xff]
  %v64 = vld [vmem:[%s1 + $0x48] sm:$0xff]
  %v65 = vld [vmem:[%s1 + $0x50] sm:$0xff]
  %v66 = vld [vmem:[%s1 + $0x58] sm:$0xff]
  %v67 = vld [vmem:[%s1 + $0x60] sm:$0xff]
  %v68 = vld [vmem:[%s1 + $0x68] sm:$0xff]
  %v69 = vld [vmem:[%s1 + $0x70] sm:$0xff]
  %v70 = vld [vmem:[%s1 + $0x78] sm:$0xff]
  %v71 = vld [vmem:[%s1 + $0x80] sm:$0xff]
  %v72 = vld [vmem:[%s1 + $0x88] sm:$0xff]
  %v73 = vld [vmem:[%s1 + $0x90] sm:$0xff]
  %v74 = vld [vmem:[%s1 + $0x98] sm:$0xff]
  %v75 = vld [vmem:[%s1 + $0xa0] sm:$0xff]
  %v76 = vld [vmem:[%s1 + $0xa8] sm:$0xff]
  %v77 = vld [vmem:[%s1 + $0xb0] sm:$0xff]
  %v78 = vld [vmem:[%s1 + $0xb8] sm:$0xff]
  %v79 = vld [vmem:[%s1 + $0xc0] sm:$0xff]
  %v80 = vld [vmem:[%s1 + $0xc8] sm:$0xff]
  %v81 = vld [vmem:[%s1 + $0xd0] sm:$0xff]
  %v82 = vld [vmem:[%s1 + $0xd8] sm:$0xff]
  %v83 = vld [vmem:[%s1 + $0xe0] sm:$0xff]
  %v84 = vld [vmem:[%s1 + $0xe8] sm:$0xff]
  %v85 = vld [vmem:[%s1 + $0xf0] sm:$0xff]
  %v86 = vld [vmem:[%s1 + $0xf8] sm:$0xff]
  %v87 = vld [vmem:[%s1 + $0x100] sm:$0xff]
  %v88 = vld [vmem:[%s1 + $0x108] sm:$0xff]
  %v89 = vld [vmem:[%s1 + $0x110] sm:$0xff]
  %v90 = vld [vmem:[%s1 + $0x118] sm:$0xff]
  %v91 = vld [vmem:[%s1 + $0x120] sm:$0xff]
  %v92 = vld [vmem:[%s1 + $0x128] sm:$0xff]
  %94 = vset.pattern.permute.xlu0 0
  %95 = vperm.xlu0 %94, %v55
  %v96 = vpop.permute.xlu0 %95
  %99 = vset.pattern.permute.xlu0 0
  %100 = vperm.xlu0 %99, %v56
  %v101 = vpop.permute.xlu0 %100
  %104 = vset.pattern.permute.xlu0 0
  %105 = vperm.xlu0 %104, %v57
  %v106 = vpop.permute.xlu0 %105
  %109 = vset.pattern.permute.xlu0 0
  %110 = vperm.xlu0 %109, %v58
  %v111 = vpop.permute.xlu0 %110
  %114 = vset.pattern.permute.xlu0 0
  %115 = vperm.xlu0 %114, %v59
  %v116 = vpop.permute.xlu0 %115
  %119 = vset.pattern.permute.xlu0 0
  %120 = vperm.xlu0 %119, %v60
  %v121 = vpop.permute.xlu0 %120
  %124 = vset.pattern.permute.xlu0 0
  %125 = vperm.xlu0 %124, %v61
  %v126 = vpop.permute.xlu0 %125
  %129 = vset.pattern.permute.xlu0 0
  %130 = vperm.xlu0 %129, %v62
  %v131 = vpop.permute.xlu0 %130
  %134 = vset.pattern.permute.xlu0 0
  %135 = vperm.xlu0 %134, %v63
  %v136 = vpop.permute.xlu0 %135
  %139 = vset.pattern.permute.xlu0 0
  %140 = vperm.xlu0 %139, %v64
  %v141 = vpop.permute.xlu0 %140
  %144 = vset.pattern.permute.xlu0 0
  %145 = vperm.xlu0 %144, %v65
  %v146 = vpop.permute.xlu0 %145
  %149 = vset.pattern.permute.xlu0 0
  %150 = vperm.xlu0 %149, %v66
  %v151 = vpop.permute.xlu0 %150
  %154 = vset.pattern.permute.xlu0 0
  %155 = vperm.xlu0 %154, %v67
  %v156 = vpop.permute.xlu0 %155
  %159 = vset.pattern.permute.xlu0 0
  %160 = vperm.xlu0 %159, %v68
  %v161 = vpop.permute.xlu0 %160
  %164 = vset.pattern.permute.xlu0 0
  %165 = vperm.xlu0 %164, %v69
  %v166 = vpop.permute.xlu0 %165
  %169 = vset.pattern.permute.xlu0 0
  %170 = vperm.xlu0 %169, %v70
  %v171 = vpop.permute.xlu0 %170
  %174 = vset.pattern.permute.xlu0 0
  %175 = vperm.xlu0 %174, %v71
  %v176 = vpop.permute.xlu0 %175
  %179 = vset.pattern.permute.xlu0 0
  %180 = vperm.xlu0 %179, %v72
  %v181 = vpop.permute.xlu0 %180
  %184 = vset.pattern.permute.xlu0 0
  %185 = vperm.xlu0 %184, %v73
  %v186 = vpop.permute.xlu0 %185
  %189 = vset.pattern.permute.xlu0 0
  %190 = vperm.xlu0 %189, %v74
  %v191 = vpop.permute.xlu0 %190
  %194 = vset.pattern.permute.xlu0 0
  %195 = vperm.xlu0 %194, %v75
  %v196 = vpop.permute.xlu0 %195
  %199 = vset.pattern.permute.xlu0 0
  %200 = vperm.xlu0 %199, %v76
  %v201 = vpop.permute.xlu0 %200
  %204 = vset.pattern.permute.xlu0 0
  %205 = vperm.xlu0 %204, %v77
  %v206 = vpop.permute.xlu0 %205
  %209 = vset.pattern.permute.xlu0 0
  %210 = vperm.xlu0 %209, %v78
  %v211 = vpop.permute.xlu0 %210
  %214 = vset.pattern.permute.xlu0 0
  %215 = vperm.xlu0 %214, %v79
  %v216 = vpop.permute.xlu0 %215
  %219 = vset.pattern.permute.xlu0 0
  %220 = vperm.xlu0 %219, %v80
  %v221 = vpop.permute.xlu0 %220
  %224 = vset.pattern.permute.xlu0 0
  %225 = vperm.xlu0 %224, %v81
  %v226 = vpop.permute.xlu0 %225
  %229 = vset.pattern.permute.xlu0 0
  %230 = vperm.xlu0 %229, %v82
  %v231 = vpop.permute.xlu0 %230
  %234 = vset.pattern.permute.xlu0 0
  %235 = vperm.xlu0 %234, %v83
  %v236 = vpop.permute.xlu0 %235
  %239 = vset.pattern.permute.xlu0 0
  %240 = vperm.xlu0 %239, %v84
  %v241 = vpop.permute.xlu0 %240
  %244 = vset.pattern.permute.xlu0 0
  %245 = vperm.xlu0 %244, %v85
  %v246 = vpop.permute.xlu0 %245
  %249 = vset.pattern.permute.xlu0 0
  %250 = vperm.xlu0 %249, %v86
  %v251 = vpop.permute.xlu0 %250
  %254 = vset.pattern.permute.xlu0 0
  %255 = vperm.xlu0 %254, %v87
  %v256 = vpop.permute.xlu0 %255
  %259 = vset.pattern.permute.xlu0 0
  %260 = vperm.xlu0 %259, %v88
  %v261 = vpop.permute.xlu0 %260
  %264 = vset.pattern.permute.xlu0 0
  %265 = vperm.xlu0 %264, %v89
  %v266 = vpop.permute.xlu0 %265
  %269 = vset.pattern.permute.xlu0 0
  %270 = vperm.xlu0 %269, %v90
  %v271 = vpop.permute.xlu0 %270
  %274 = vset.pattern.permute.xlu0 0
  %275 = vperm.xlu0 %274, %v91
  %v276 = vpop.permute.xlu0 %275
  %279 = vset.pattern.permute.xlu0 0
  %280 = vperm.xlu0 %279, %v92
  %v281 = vpop.permute.xlu0 %280
  %v283 = vmul.f32 %v17, %v96
  %v284 = vmul.f32 %v18, %v101
  %v285 = vmul.f32 %v19, %v106
  %v286 = vmul.f32 %v20, %v111
  %v287 = vmul.f32 %v21, %v116
  %v288 = vmul.f32 %v22, %v121
  %v289 = vmul.f32 %v23, %v126
  %v290 = vmul.f32 %v24, %v131
  %v291 = vmul.f32 %v25, %v136
  %v292 = vmul.f32 %v26, %v141
  %v293 = vmul.f32 %v27, %v146
  %v294 = vmul.f32 %v28, %v151
  %v295 = vmul.f32 %v29, %v156
  %v296 = vmul.f32 %v30, %v161
  %v297 = vmul.f32 %v31, %v166
  %v298 = vmul.f32 %v32, %v171
  %v299 = vmul.f32 %v33, %v176
  %v300 = vmul.f32 %v34, %v181
  %v301 = vmul.f32 %v35, %v186
  %v302 = vmul.f32 %v36, %v191
  %v303 = vmul.f32 %v37, %v196
  %v304 = vmul.f32 %v38, %v201
  %v305 = vmul.f32 %v39, %v206
  %v306 = vmul.f32 %v40, %v211
  %v307 = vmul.f32 %v41, %v216
  %v308 = vmul.f32 %v42, %v221
  %v309 = vmul.f32 %v43, %v226
  %v310 = vmul.f32 %v44, %v231
  %v311 = vmul.f32 %v45, %v236
  %v312 = vmul.f32 %v46, %v241
  %v313 = vmul.f32 %v47, %v246
  %v314 = vmul.f32 %v48, %v251
  %v315 = vmul.f32 %v49, %v256
  %v316 = vmul.f32 %v50, %v261
  %v317 = vmul.f32 %v51, %v266
  %v318 = vmul.f32 %v52, %v271
  %v319 = vmul.f32 %v53, %v276
  %v320 = vmul.f32 %v54, %v281
  %v321 = vld [vmem:[%s2] sm:$0xff]
  %v322 = vld [vmem:[%s2 + $0x8] sm:$0xff]
  %v323 = vld [vmem:[%s2 + $0x10] sm:$0xff]
  %v324 = vld [vmem:[%s2 + $0x18] sm:$0xff]
  %v325 = vld [vmem:[%s3] sm:$0x1]
  %v327 = vlaneseq
  %v328 = vshrl.u32 %v327, 7
  %v329 = vsub.s32 0, %v328
  %v330 = vrot.slane %v325, %v329
  %vm332 = vcmask 261120
  %v334 = vsel %vm332, %v283, 0
  %v337 = vsel %vm332, %v284, 0
  %v340 = vsel %vm332, %v285, 0
  %v343 = vsel %vm332, %v286, 0
  %v346 = vsel %vm332, %v287, 0
  %v349 = vsel %vm332, %v288, 0
  %v352 = vsel %vm332, %v289, 0
  %v355 = vsel %vm332, %v290, 0
  %v358 = vsel %vm332, %v291, 0
  %v361 = vsel %vm332, %v292, 0
  %v364 = vsel %vm332, %v293, 0
  %v367 = vsel %vm332, %v294, 0
  %v370 = vsel %vm332, %v295, 0
  %v373 = vsel %vm332, %v296, 0
  %v376 = vsel %vm332, %v297, 0
  %v379 = vsel %vm332, %v298, 0
  %v382 = vsel %vm332, %v299, 0
  %v385 = vsel %vm332, %v300, 0
  %v388 = vsel %vm332, %v301, 0
  %v391 = vsel %vm332, %v302, 0
  %v394 = vsel %vm332, %v303, 0
  %v397 = vsel %vm332, %v304, 0
  %v400 = vsel %vm332, %v305, 0
  %v403 = vsel %vm332, %v306, 0
  %v406 = vsel %vm332, %v307, 0
  %v409 = vsel %vm332, %v308, 0
  %v412 = vsel %vm332, %v309, 0
  %v415 = vsel %vm332, %v310, 0
  %v418 = vsel %vm332, %v311, 0
  %v421 = vsel %vm332, %v312, 0
  %v424 = vsel %vm332, %v313, 0
  %v427 = vsel %vm332, %v314, 0
  %v430 = vsel %vm332, %v315, 0
  %v433 = vsel %vm332, %v316, 0
  %v436 = vsel %vm332, %v317, 0
  %v439 = vsel %vm332, %v318, 0
  %v442 = vsel %vm332, %v319, 0
  %v445 = vsel %vm332, %v320, 0
  %447 = vmatprep.subr.mxu0 0.0
  %448 = vmatpush1.msra.mxu0 0.0
  %449 = vmatprep.subr.mxu0 0.0
  %450 = vmatpush1.msra.mxu0 0.0
  %451 = vmatprep.subr.mxu0 0.0
  %452 = vmatpush1.msra.mxu0 0.0
  %453 = vmatprep.subr.mxu0 0.0
  %454 = vmatpush1.msra.mxu0 0.0
  %455 = vmatprep.subr.mxu0 0.0
  %456 = vmatpush1.msra.mxu0 0.0
  %457 = vmatprep.subr.mxu0 0.0
  %458 = vmatpush1.msra.mxu0 0.0
  %459 = vmatprep.subr.mxu0 0.0
  %460 = vmatpush1.msra.mxu0 0.0
  %461 = vmatprep.subr.mxu0 0.0
  %462 = vmatpush1.msra.mxu0 0.0
  %463 = vmatprep.subr.mxu0 0.0
  %464 = vmatpush1.msra.mxu0 0.0
  %465 = vmatprep.subr.mxu0 0.0
  %466 = vmatpush1.msra.mxu0 0.0
  %467 = vmatprep.subr.mxu0 0.0
  %468 = vmatpush1.msra.mxu0 0.0
  %469 = vmatprep.subr.mxu0 0.0
  %470 = vmatpush1.msra.mxu0 0.0
  %471 = vmatprep.subr.mxu0 0.0
  %472 = vmatpush1.msra.mxu0 %v324
  %473 = vmatprep.subr.mxu0 0.0
  %474 = vmatpush1.msra.mxu0 %v323
  %475 = vmatprep.subr.mxu0 0.0
  %476 = vmatpush1.msra.mxu0 %v322
  %477 = vmatprep.subr.mxu0 0.0
  %478 = vmatpush1.msra.mxu0 %v321
  %479 = vmatprep.subr.mxu0 0.0
  %480 = vmatpush2.msra.mxu0 0.0
  %481 = vmatprep.subr.mxu0 0.0
  %482 = vmatpush2.msra.mxu0 0.0
  %483 = vmatprep.subr.mxu0 0.0
  %484 = vmatpush2.msra.mxu0 0.0
  %485 = vmatprep.subr.mxu0 0.0
  %486 = vmatpush2.msra.mxu0 0.0
  %487 = vmatprep.subr.mxu0 0.0
  %488 = vmatpush2.msra.mxu0 0.0
  %489 = vmatprep.subr.mxu0 0.0
  %490 = vmatpush2.msra.mxu0 0.0
  %491 = vmatprep.subr.mxu0 0.0
  %492 = vmatpush2.msra.mxu0 0.0
  %493 = vmatprep.subr.mxu0 0.0
  %494 = vmatpush2.msra.mxu0 0.0
  %495 = vmatprep.subr.mxu0 0.0
  %496 = vmatpush2.msra.mxu0 0.0
  %497 = vmatprep.subr.mxu0 0.0
  %498 = vmatpush2.msra.mxu0 0.0
  %499 = vmatprep.subr.mxu0 0.0
  %500 = vmatpush2.msra.mxu0 0.0
  %501 = vmatprep.subr.mxu0 0.0
  %502 = vmatpush2.msra.mxu0 0.0
  %503 = vmatprep.subr.mxu0 0.0
  %504 = vmatpush2.msra.mxu0 0.0
  %505 = vmatprep.subr.mxu0 0.0
  %506 = vmatpush2.msra.mxu0 0.0
  %507 = vmatprep.subr.mxu0 0.0
  %508 = vmatpush2.msra.mxu0 0.0
  %509 = vmatprep.subr.mxu0 0.0
  %510 = vmatpush2.msra.mxu0 0.0
  %511 = vmatprep.mubr.f32.mxu0 0.0
  %512 = vmatmul.mubr.f32.gmra.mxu0 %v334
  %v513 = vpop.f32.mrf.mxu0
  %v514 = vadd.f32 %v330, %v513
  %v515 = vpop.f32.mrf.mxu0
  %516 = vmatprep.mubr.f32.mxu0 0.0
  %517 = vmatmul.mubr.f32.gmra.mxu0 %v337
  %v518 = vpop.f32.mrf.mxu0
  %v519 = vadd.f32 %v330, %v518
  %v520 = vpop.f32.mrf.mxu0
  %521 = vmatprep.mubr.f32.mxu0 0.0
  %522 = vmatmul.mubr.f32.gmra.mxu0 %v340
  %v523 = vpop.f32.mrf.mxu0
  %v524 = vadd.f32 %v330, %v523
  %v525 = vpop.f32.mrf.mxu0
  %526 = vmatprep.mubr.f32.mxu0 0.0
  %527 = vmatmul.mubr.f32.gmra.mxu0 %v343
  %v528 = vpop.f32.mrf.mxu0
  %v529 = vadd.f32 %v330, %v528
  %v530 = vpop.f32.mrf.mxu0
  %531 = vmatprep.mubr.f32.mxu0 0.0
  %532 = vmatmul.mubr.f32.gmra.mxu0 %v346
  %v533 = vpop.f32.mrf.mxu0
  %v534 = vadd.f32 %v330, %v533
  %v535 = vpop.f32.mrf.mxu0
  %536 = vmatprep.mubr.f32.mxu0 0.0
  %537 = vmatmul.mubr.f32.gmra.mxu0 %v349
  %v538 = vpop.f32.mrf.mxu0
  %v539 = vadd.f32 %v330, %v538
  %v540 = vpop.f32.mrf.mxu0
  %541 = vmatprep.mubr.f32.mxu0 0.0
  %542 = vmatmul.mubr.f32.gmra.mxu0 %v352
  %v543 = vpop.f32.mrf.mxu0
  %v544 = vadd.f32 %v330, %v543
  %v545 = vpop.f32.mrf.mxu0
  %546 = vmatprep.mubr.f32.mxu0 0.0
  %547 = vmatmul.mubr.f32.gmra.mxu0 %v355
  %v548 = vpop.f32.mrf.mxu0
  %v549 = vadd.f32 %v330, %v548
  %v550 = vpop.f32.mrf.mxu0
  %551 = vmatprep.mubr.f32.mxu0 0.0
  %552 = vmatmul.mubr.f32.gmra.mxu0 %v358
  %v553 = vpop.f32.mrf.mxu0
  %v554 = vadd.f32 %v330, %v553
  %v555 = vpop.f32.mrf.mxu0
  %556 = vmatprep.mubr.f32.mxu0 0.0
  %557 = vmatmul.mubr.f32.gmra.mxu0 %v361
  %v558 = vpop.f32.mrf.mxu0
  %v559 = vadd.f32 %v330, %v558
  %v560 = vpop.f32.mrf.mxu0
  %561 = vmatprep.mubr.f32.mxu0 0.0
  %562 = vmatmul.mubr.f32.gmra.mxu0 %v364
  %v563 = vpop.f32.mrf.mxu0
  %v564 = vadd.f32 %v330, %v563
  %v565 = vpop.f32.mrf.mxu0
  %566 = vmatprep.mubr.f32.mxu0 0.0
  %567 = vmatmul.mubr.f32.gmra.mxu0 %v367
  %v568 = vpop.f32.mrf.mxu0
  %v569 = vadd.f32 %v330, %v568
  %v570 = vpop.f32.mrf.mxu0
  %571 = vmatprep.mubr.f32.mxu0 0.0
  %572 = vmatmul.mubr.f32.gmra.mxu0 %v370
  %v573 = vpop.f32.mrf.mxu0
  %v574 = vadd.f32 %v330, %v573
  %v575 = vpop.f32.mrf.mxu0
  %576 = vmatprep.mubr.f32.mxu0 0.0
  %577 = vmatmul.mubr.f32.gmra.mxu0 %v373
  %v578 = vpop.f32.mrf.mxu0
  %v579 = vadd.f32 %v330, %v578
  %v580 = vpop.f32.mrf.mxu0
  %581 = vmatprep.mubr.f32.mxu0 0.0
  %582 = vmatmul.mubr.f32.gmra.mxu0 %v376
  %v583 = vpop.f32.mrf.mxu0
  %v584 = vadd.f32 %v330, %v583
  %v585 = vpop.f32.mrf.mxu0
  %586 = vmatprep.mubr.f32.mxu0 0.0
  %587 = vmatmul.mubr.f32.gmra.mxu0 %v379
  %v588 = vpop.f32.mrf.mxu0
  %v589 = vadd.f32 %v330, %v588
  %v590 = vpop.f32.mrf.mxu0
  %591 = vmatprep.mubr.f32.mxu0 0.0
  %592 = vmatmul.mubr.f32.gmra.mxu0 %v382
  %v593 = vpop.f32.mrf.mxu0
  %v594 = vadd.f32 %v330, %v593
  %v595 = vpop.f32.mrf.mxu0
  %596 = vmatprep.mubr.f32.mxu0 0.0
  %597 = vmatmul.mubr.f32.gmra.mxu0 %v385
  %v598 = vpop.f32.mrf.mxu0
  %v599 = vadd.f32 %v330, %v598
  %v600 = vpop.f32.mrf.mxu0
  %601 = vmatprep.mubr.f32.mxu0 0.0
  %602 = vmatmul.mubr.f32.gmra.mxu0 %v388
  %v603 = vpop.f32.mrf.mxu0
  %v604 = vadd.f32 %v330, %v603
  %v605 = vpop.f32.mrf.mxu0
  %606 = vmatprep.mubr.f32.mxu0 0.0
  %607 = vmatmul.mubr.f32.gmra.mxu0 %v391
  %v608 = vpop.f32.mrf.mxu0
  %v609 = vadd.f32 %v330, %v608
  %v610 = vpop.f32.mrf.mxu0
  %611 = vmatprep.mubr.f32.mxu0 0.0
  %612 = vmatmul.mubr.f32.gmra.mxu0 %v394
  %v613 = vpop.f32.mrf.mxu0
  %v614 = vadd.f32 %v330, %v613
  %v615 = vpop.f32.mrf.mxu0
  %616 = vmatprep.mubr.f32.mxu0 0.0
  %617 = vmatmul.mubr.f32.gmra.mxu0 %v397
  %v618 = vpop.f32.mrf.mxu0
  %v619 = vadd.f32 %v330, %v618
  %v620 = vpop.f32.mrf.mxu0
  %621 = vmatprep.mubr.f32.mxu0 0.0
  %622 = vmatmul.mubr.f32.gmra.mxu0 %v400
  %v623 = vpop.f32.mrf.mxu0
  %v624 = vadd.f32 %v330, %v623
  %v625 = vpop.f32.mrf.mxu0
  %626 = vmatprep.mubr.f32.mxu0 0.0
  %627 = vmatmul.mubr.f32.gmra.mxu0 %v403
  %v628 = vpop.f32.mrf.mxu0
  %v629 = vadd.f32 %v330, %v628
  %v630 = vpop.f32.mrf.mxu0
  %631 = vmatprep.mubr.f32.mxu0 0.0
  %632 = vmatmul.mubr.f32.gmra.mxu0 %v406
  %v633 = vpop.f32.mrf.mxu0
  %v634 = vadd.f32 %v330, %v633
  %v635 = vpop.f32.mrf.mxu0
  %636 = vmatprep.mubr.f32.mxu0 0.0
  %637 = vmatmul.mubr.f32.gmra.mxu0 %v409
  %v638 = vpop.f32.mrf.mxu0
  %v639 = vadd.f32 %v330, %v638
  %v640 = vpop.f32.mrf.mxu0
  %641 = vmatprep.mubr.f32.mxu0 0.0
  %642 = vmatmul.mubr.f32.gmra.mxu0 %v412
  %v643 = vpop.f32.mrf.mxu0
  %v644 = vadd.f32 %v330, %v643
  %v645 = vpop.f32.mrf.mxu0
  %646 = vmatprep.mubr.f32.mxu0 0.0
  %647 = vmatmul.mubr.f32.gmra.mxu0 %v415
  %v648 = vpop.f32.mrf.mxu0
  %v649 = vadd.f32 %v330, %v648
  %v650 = vpop.f32.mrf.mxu0
  %651 = vmatprep.mubr.f32.mxu0 0.0
  %652 = vmatmul.mubr.f32.gmra.mxu0 %v418
  %v653 = vpop.f32.mrf.mxu0
  %v654 = vadd.f32 %v330, %v653
  %v655 = vpop.f32.mrf.mxu0
  %656 = vmatprep.mubr.f32.mxu0 0.0
  %657 = vmatmul.mubr.f32.gmra.mxu0 %v421
  %v658 = vpop.f32.mrf.mxu0
  %v659 = vadd.f32 %v330, %v658
  %v660 = vpop.f32.mrf.mxu0
  %661 = vmatprep.mubr.f32.mxu0 0.0
  %662 = vmatmul.mubr.f32.gmra.mxu0 %v424
  %v663 = vpop.f32.mrf.mxu0
  %v664 = vadd.f32 %v330, %v663
  %v665 = vpop.f32.mrf.mxu0
  %666 = vmatprep.mubr.f32.mxu0 0.0
  %667 = vmatmul.mubr.f32.gmra.mxu0 %v427
  %v668 = vpop.f32.mrf.mxu0
  %v669 = vadd.f32 %v330, %v668
  %v670 = vpop.f32.mrf.mxu0
  %671 = vmatprep.mubr.f32.mxu0 0.0
  %672 = vmatmul.mubr.f32.gmra.mxu0 %v430
  %v673 = vpop.f32.mrf.mxu0
  %v674 = vadd.f32 %v330, %v673
  %v675 = vpop.f32.mrf.mxu0
  %676 = vmatprep.mubr.f32.mxu0 0.0
  %677 = vmatmul.mubr.f32.gmra.mxu0 %v433
  %v678 = vpop.f32.mrf.mxu0
  %v679 = vadd.f32 %v330, %v678
  %v680 = vpop.f32.mrf.mxu0
  %681 = vmatprep.mubr.f32.mxu0 0.0
  %682 = vmatmul.mubr.f32.gmra.mxu0 %v436
  %v683 = vpop.f32.mrf.mxu0
  %v684 = vadd.f32 %v330, %v683
  %v685 = vpop.f32.mrf.mxu0
  %686 = vmatprep.mubr.f32.mxu0 0.0
  %687 = vmatmul.mubr.f32.gmra.mxu0 %v439
  %v688 = vpop.f32.mrf.mxu0
  %v689 = vadd.f32 %v330, %v688
  %v690 = vpop.f32.mrf.mxu0
  %691 = vmatprep.mubr.f32.mxu0 0.0
  %692 = vmatmul.mubr.f32.gmra.mxu0 %v442
  %v693 = vpop.f32.mrf.mxu0
  %v694 = vadd.f32 %v330, %v693
  %v695 = vpop.f32.mrf.mxu0
  %696 = vmatprep.mubr.f32.mxu0 0.0
  %697 = vmatmul.mubr.f32.gmra.mxu0 %v445
  %v698 = vpop.f32.mrf.mxu0
  %v699 = vadd.f32 %v330, %v698
  %v700 = vpop.f32.mrf.mxu0
  %701 = vdwg.mxu0
  %v702 = vmax.f32 %v514, 0.0
  %v703 = vmax.f32 %v519, 0.0
  %v704 = vmax.f32 %v524, 0.0
  %v705 = vmax.f32 %v529, 0.0
  %v706 = vmax.f32 %v534, 0.0
  %v707 = vmax.f32 %v539, 0.0
  %v708 = vmax.f32 %v544, 0.0
  %v709 = vmax.f32 %v549, 0.0
  %v710 = vmax.f32 %v554, 0.0
  %v711 = vmax.f32 %v559, 0.0
  %v712 = vmax.f32 %v564, 0.0
  %v713 = vmax.f32 %v569, 0.0
  %v714 = vmax.f32 %v574, 0.0
  %v715 = vmax.f32 %v579, 0.0
  %v716 = vmax.f32 %v584, 0.0
  %v717 = vmax.f32 %v589, 0.0
  %v718 = vmax.f32 %v594, 0.0
  %v719 = vmax.f32 %v599, 0.0
  %v720 = vmax.f32 %v604, 0.0
  %v721 = vmax.f32 %v609, 0.0
  %v722 = vmax.f32 %v614, 0.0
  %v723 = vmax.f32 %v619, 0.0
  %v724 = vmax.f32 %v624, 0.0
  %v725 = vmax.f32 %v629, 0.0
  %v726 = vmax.f32 %v634, 0.0
  %v727 = vmax.f32 %v639, 0.0
  %v728 = vmax.f32 %v644, 0.0
  %v729 = vmax.f32 %v649, 0.0
  %v730 = vmax.f32 %v654, 0.0
  %v731 = vmax.f32 %v659, 0.0
  %v732 = vmax.f32 %v664, 0.0
  %v733 = vmax.f32 %v669, 0.0
  %v734 = vmax.f32 %v674, 0.0
  %v735 = vmax.f32 %v679, 0.0
  %v736 = vmax.f32 %v684, 0.0
  %v737 = vmax.f32 %v689, 0.0
  %v738 = vmax.f32 %v694, 0.0
  %v739 = vmax.f32 %v699, 0.0
  %vm740 = vcmask 523264
  %741 = vst.msk [vmem:[%s4] sm:$0xff] %vm740, %v702
  %742 = vst.msk [vmem:[%s4 + $0x8] sm:$0xff] %vm740, %v703
  %743 = vst.msk [vmem:[%s4 + $0x10] sm:$0xff] %vm740, %v704
  %744 = vst.msk [vmem:[%s4 + $0x18] sm:$0xff] %vm740, %v705
  %745 = vst.msk [vmem:[%s4 + $0x20] sm:$0xff] %vm740, %v706
  %746 = vst.msk [vmem:[%s4 + $0x28] sm:$0xff] %vm740, %v707
  %747 = vst.msk [vmem:[%s4 + $0x30] sm:$0xff] %vm740, %v708
  %748 = vst.msk [vmem:[%s4 + $0x38] sm:$0xff] %vm740, %v709
  %749 = vst.msk [vmem:[%s4 + $0x40] sm:$0xff] %vm740, %v710
  %750 = vst.msk [vmem:[%s4 + $0x48] sm:$0xff] %vm740, %v711
  %751 = vst.msk [vmem:[%s4 + $0x50] sm:$0xff] %vm740, %v712
  %752 = vst.msk [vmem:[%s4 + $0x58] sm:$0xff] %vm740, %v713
  %753 = vst.msk [vmem:[%s4 + $0x60] sm:$0xff] %vm740, %v714
  %754 = vst.msk [vmem:[%s4 + $0x68] sm:$0xff] %vm740, %v715
  %755 = vst.msk [vmem:[%s4 + $0x70] sm:$0xff] %vm740, %v716
  %756 = vst.msk [vmem:[%s4 + $0x78] sm:$0xff] %vm740, %v717
  %757 = vst.msk [vmem:[%s4 + $0x80] sm:$0xff] %vm740, %v718
  %758 = vst.msk [vmem:[%s4 + $0x88] sm:$0xff] %vm740, %v719
  %759 = vst.msk [vmem:[%s4 + $0x90] sm:$0xff] %vm740, %v720
  %760 = vst.msk [vmem:[%s4 + $0x98] sm:$0xff] %vm740, %v721
  %761 = vst.msk [vmem:[%s4 + $0xa0] sm:$0xff] %vm740, %v722
  %762 = vst.msk [vmem:[%s4 + $0xa8] sm:$0xff] %vm740, %v723
  %763 = vst.msk [vmem:[%s4 + $0xb0] sm:$0xff] %vm740, %v724
  %764 = vst.msk [vmem:[%s4 + $0xb8] sm:$0xff] %vm740, %v725
  %765 = vst.msk [vmem:[%s4 + $0xc0] sm:$0xff] %vm740, %v726
  %766 = vst.msk [vmem:[%s4 + $0xc8] sm:$0xff] %vm740, %v727
  %767 = vst.msk [vmem:[%s4 + $0xd0] sm:$0xff] %vm740, %v728
  %768 = vst.msk [vmem:[%s4 + $0xd8] sm:$0xff] %vm740, %v729
  %769 = vst.msk [vmem:[%s4 + $0xe0] sm:$0xff] %vm740, %v730
  %770 = vst.msk [vmem:[%s4 + $0xe8] sm:$0xff] %vm740, %v731
  %771 = vst.msk [vmem:[%s4 + $0xf0] sm:$0xff] %vm740, %v732
  %772 = vst.msk [vmem:[%s4 + $0xf8] sm:$0xff] %vm740, %v733
  %773 = vst.msk [vmem:[%s4 + $0x100] sm:$0xff] %vm740, %v734
  %774 = vst.msk [vmem:[%s4 + $0x108] sm:$0xff] %vm740, %v735
  %775 = vst.msk [vmem:[%s4 + $0x110] sm:$0xff] %vm740, %v736
  %776 = vst.msk [vmem:[%s4 + $0x118] sm:$0xff] %vm740, %v737
  %777 = vst.msk [vmem:[%s4 + $0x120] sm:$0xff] %vm740, %v738
  %778 = vst.msk [vmem:[%s4 + $0x128] sm:$0xff] %vm740, %v739
  // Predicated region
  $region18: #{tpu_custom_call.1} parent=0 // pred_check
    _
  $region19: #{tpu_custom_call.1} parent=0 // pred_check_branch
    %780 = sbr.rel (0) target = $region21
  $region20: #{tpu_custom_call.1} parent=0 // pred_region
    _
  $region21: #{tpu_custom_call.1} parent=0 // pred_fallthru
    _
  // Predicated region
  $region22: #{tpu_custom_call.1} parent=0 // pred_check
    _
  $region23: #{tpu_custom_call.1} parent=0 // pred_check_branch
    %782 = sbr.rel (0) target = $region25
  $region24: #{tpu_custom_call.1} parent=0 // pred_region
    _
  $region25: #{tpu_custom_call.1} parent=0 // pred_fallthru
    _

// kernel: tpu_custom_call.1
$region0: #{tpu_custom_call.1}
  #allocation0 [shape = 'u32[]', space=smem, size = 0x4, offset = 0x4, fixed_abs, tag = 'smem constant byte address 0x4 - core index']
  #allocation1 [shape = 'u32[144,128]{1,0:T(1,128)}', space=vmem, size = 0x12000, scoped, tag = 'internal scratch']
  %s0 = inlined_call_operand.vmem [shape: f32[304,32], index: 0, kind: input, shape index: {}]
  %s1 = inlined_call_operand.vmem [shape: f32[304,1], index: 1, kind: input, shape index: {}]
  %s2 = inlined_call_operand.vmem [shape: f32[32,64], index: 2, kind: input, shape index: {}]
  %s3 = inlined_call_operand.vmem [shape: f32[1,64], index: 3, kind: input, shape index: {}]
  %s4 = inlined_call_operand.vmem [shape: f32[304,64], index: 4, kind: output, shape index: {}]
  %s5 = sld [smem:[#allocation0]]
  $region26: #{tpu_custom_call.1} parent=0
    _
  %s7 = ssub.s32 1, %s5
  %s8 = scalar_select 0, %s7, %s5
  // Predicated region
  $region2: #{tpu_custom_call.1} parent=0 // pred_check
    _
  $region3: #{tpu_custom_call.1} parent=0 // pred_check_branch
    %10 = sbr.rel (0) target = $region5
  $region4: #{tpu_custom_call.1} parent=0 // pred_region
    _
  $region5: #{tpu_custom_call.1} parent=0 // pred_fallthru
    _
  // Predicated region
  $region6: #{tpu_custom_call.1} parent=0 // pred_check
    _
  $region7: #{tpu_custom_call.1} parent=0 // pred_check_branch
    %12 = sbr.rel (0) target = $region9
  $region8: #{tpu_custom_call.1} parent=0 // pred_region
    _
  $region9: #{tpu_custom_call.1} parent=0 // pred_fallthru
    _
  // Predicated region
  $region10: #{tpu_custom_call.1} parent=0 // pred_check
    _
  $region11: #{tpu_custom_call.1} parent=0 // pred_check_branch
    %14 = sbr.rel (0) target = $region13
  $region12: #{tpu_custom_call.1} parent=0 // pred_region
    _
  $region13: #{tpu_custom_call.1} parent=0 // pred_fallthru
    _
  // Predicated region
  $region14: #{tpu_custom_call.1} parent=0 // pred_check
    _
  $region15: #{tpu_custom_call.1} parent=0 // pred_check_branch
    %16 = sbr.rel (0) target = $region17
  $region16: #{tpu_custom_call.1} parent=0 // pred_region
    _
  $region17: #{tpu_custom_call.1} parent=0 // pred_fallthru
    _
  %v17 = vld [vmem:[%s0] sm:$0xff]
  %v18 = vld [vmem:[%s0 + $0x8] sm:$0xff]
  %v19 = vld [vmem:[%s0 + $0x10] sm:$0xff]
  %v20 = vld [vmem:[%s0 + $0x18] sm:$0xff]
  %v21 = vld [vmem:[%s0 + $0x20] sm:$0xff]
  %v22 = vld [vmem:[%s0 + $0x28] sm:$0xff]
  %v23 = vld [vmem:[%s0 + $0x30] sm:$0xff]
  %v24 = vld [vmem:[%s0 + $0x38] sm:$0xff]
  %v25 = vld [vmem:[%s0 + $0x40] sm:$0xff]
  %v26 = vld [vmem:[%s0 + $0x48] sm:$0xff]
  %v27 = vld [vmem:[%s0 + $0x50] sm:$0xff]
  %v28 = vld [vmem:[%s0 + $0x58] sm:$0xff]
  %v29 = vld [vmem:[%s0 + $0x60] sm:$0xff]
  %v30 = vld [vmem:[%s0 + $0x68] sm:$0xff]
  %v31 = vld [vmem:[%s0 + $0x70] sm:$0xff]
  %v32 = vld [vmem:[%s0 + $0x78] sm:$0xff]
  %v33 = vld [vmem:[%s0 + $0x80] sm:$0xff]
  %v34 = vld [vmem:[%s0 + $0x88] sm:$0xff]
  %v35 = vld [vmem:[%s0 + $0x90] sm:$0xff]
  %v36 = vld [vmem:[%s0 + $0x98] sm:$0xff]
  %v37 = vld [vmem:[%s0 + $0xa0] sm:$0xff]
  %v38 = vld [vmem:[%s0 + $0xa8] sm:$0xff]
  %v39 = vld [vmem:[%s0 + $0xb0] sm:$0xff]
  %v40 = vld [vmem:[%s0 + $0xb8] sm:$0xff]
  %v41 = vld [vmem:[%s0 + $0xc0] sm:$0xff]
  %v42 = vld [vmem:[%s0 + $0xc8] sm:$0xff]
  %v43 = vld [vmem:[%s0 + $0xd0] sm:$0xff]
  %v44 = vld [vmem:[%s0 + $0xd8] sm:$0xff]
  %v45 = vld [vmem:[%s0 + $0xe0] sm:$0xff]
  %v46 = vld [vmem:[%s0 + $0xe8] sm:$0xff]
  %v47 = vld [vmem:[%s0 + $0xf0] sm:$0xff]
  %v48 = vld [vmem:[%s0 + $0xf8] sm:$0xff]
  %v49 = vld [vmem:[%s0 + $0x100] sm:$0xff]
  %v50 = vld [vmem:[%s0 + $0x108] sm:$0xff]
  %v51 = vld [vmem:[%s0 + $0x110] sm:$0xff]
  %v52 = vld [vmem:[%s0 + $0x118] sm:$0xff]
  %v53 = vld [vmem:[%s0 + $0x120] sm:$0xff]
  %v54 = vld [vmem:[%s0 + $0x128] sm:$0xff]
  %v55 = vld [vmem:[%s1] sm:$0xff]
  %v56 = vld [vmem:[%s1 + $0x8] sm:$0xff]
  %v57 = vld [vmem:[%s1 + $0x10] sm:$0xff]
  %v58 = vld [vmem:[%s1 + $0x18] sm:$0xff]
  %v59 = vld [vmem:[%s1 + $0x20] sm:$0xff]
  %v60 = vld [vmem:[%s1 + $0x28] sm:$0xff]
  %v61 = vld [vmem:[%s1 + $0x30] sm:$0xff]
  %v62 = vld [vmem:[%s1 + $0x38] sm:$0xff]
  %v63 = vld [vmem:[%s1 + $0x40] sm:$0xff]
  %v64 = vld [vmem:[%s1 + $0x48] sm:$0xff]
  %v65 = vld [vmem:[%s1 + $0x50] sm:$0xff]
  %v66 = vld [vmem:[%s1 + $0x58] sm:$0xff]
  %v67 = vld [vmem:[%s1 + $0x60] sm:$0xff]
  %v68 = vld [vmem:[%s1 + $0x68] sm:$0xff]
  %v69 = vld [vmem:[%s1 + $0x70] sm:$0xff]
  %v70 = vld [vmem:[%s1 + $0x78] sm:$0xff]
  %v71 = vld [vmem:[%s1 + $0x80] sm:$0xff]
  %v72 = vld [vmem:[%s1 + $0x88] sm:$0xff]
  %v73 = vld [vmem:[%s1 + $0x90] sm:$0xff]
  %v74 = vld [vmem:[%s1 + $0x98] sm:$0xff]
  %v75 = vld [vmem:[%s1 + $0xa0] sm:$0xff]
  %v76 = vld [vmem:[%s1 + $0xa8] sm:$0xff]
  %v77 = vld [vmem:[%s1 + $0xb0] sm:$0xff]
  %v78 = vld [vmem:[%s1 + $0xb8] sm:$0xff]
  %v79 = vld [vmem:[%s1 + $0xc0] sm:$0xff]
  %v80 = vld [vmem:[%s1 + $0xc8] sm:$0xff]
  %v81 = vld [vmem:[%s1 + $0xd0] sm:$0xff]
  %v82 = vld [vmem:[%s1 + $0xd8] sm:$0xff]
  %v83 = vld [vmem:[%s1 + $0xe0] sm:$0xff]
  %v84 = vld [vmem:[%s1 + $0xe8] sm:$0xff]
  %v85 = vld [vmem:[%s1 + $0xf0] sm:$0xff]
  %v86 = vld [vmem:[%s1 + $0xf8] sm:$0xff]
  %v87 = vld [vmem:[%s1 + $0x100] sm:$0xff]
  %v88 = vld [vmem:[%s1 + $0x108] sm:$0xff]
  %v89 = vld [vmem:[%s1 + $0x110] sm:$0xff]
  %v90 = vld [vmem:[%s1 + $0x118] sm:$0xff]
  %v91 = vld [vmem:[%s1 + $0x120] sm:$0xff]
  %v92 = vld [vmem:[%s1 + $0x128] sm:$0xff]
  %94 = vset.pattern.permute.xlu0 0
  %95 = vperm.xlu0 %94, %v55
  %v96 = vpop.permute.xlu0 %95
  %99 = vset.pattern.permute.xlu0 0
  %100 = vperm.xlu0 %99, %v56
  %v101 = vpop.permute.xlu0 %100
  %104 = vset.pattern.permute.xlu0 0
  %105 = vperm.xlu0 %104, %v57
  %v106 = vpop.permute.xlu0 %105
  %109 = vset.pattern.permute.xlu0 0
  %110 = vperm.xlu0 %109, %v58
  %v111 = vpop.permute.xlu0 %110
  %114 = vset.pattern.permute.xlu0 0
  %115 = vperm.xlu0 %114, %v59
  %v116 = vpop.permute.xlu0 %115
  %119 = vset.pattern.permute.xlu0 0
  %120 = vperm.xlu0 %119, %v60
  %v121 = vpop.permute.xlu0 %120
  %124 = vset.pattern.permute.xlu0 0
  %125 = vperm.xlu0 %124, %v61
  %v126 = vpop.permute.xlu0 %125
  %129 = vset.pattern.permute.xlu0 0
  %130 = vperm.xlu0 %129, %v62
  %v131 = vpop.permute.xlu0 %130
  %134 = vset.pattern.permute.xlu0 0
  %135 = vperm.xlu0 %134, %v63
  %v136 = vpop.permute.xlu0 %135
  %139 = vset.pattern.permute.xlu0 0
  %140 = vperm.xlu0 %139, %v64
  %v141 = vpop.permute.xlu0 %140
  %144 = vset.pattern.permute.xlu0 0
  %145 = vperm.xlu0 %144, %v65
  %v146 = vpop.permute.xlu0 %145
  %149 = vset.pattern.permute.xlu0 0
  %150 = vperm.xlu0 %149, %v66
  %v151 = vpop.permute.xlu0 %150
  %154 = vset.pattern.permute.xlu0 0
  %155 = vperm.xlu0 %154, %v67
  %v156 = vpop.permute.xlu0 %155
  %159 = vset.pattern.permute.xlu0 0
  %160 = vperm.xlu0 %159, %v68
  %v161 = vpop.permute.xlu0 %160
  %164 = vset.pattern.permute.xlu0 0
  %165 = vperm.xlu0 %164, %v69
  %v166 = vpop.permute.xlu0 %165
  %169 = vset.pattern.permute.xlu0 0
  %170 = vperm.xlu0 %169, %v70
  %v171 = vpop.permute.xlu0 %170
  %174 = vset.pattern.permute.xlu0 0
  %175 = vperm.xlu0 %174, %v71
  %v176 = vpop.permute.xlu0 %175
  %179 = vset.pattern.permute.xlu0 0
  %180 = vperm.xlu0 %179, %v72
  %v181 = vpop.permute.xlu0 %180
  %184 = vset.pattern.permute.xlu0 0
  %185 = vperm.xlu0 %184, %v73
  %v186 = vpop.permute.xlu0 %185
  %189 = vset.pattern.permute.xlu0 0
  %190 = vperm.xlu0 %189, %v74
  %v191 = vpop.permute.xlu0 %190
  %194 = vset.pattern.permute.xlu0 0
  %195 = vperm.xlu0 %194, %v75
  %v196 = vpop.permute.xlu0 %195
  %199 = vset.pattern.permute.xlu0 0
  %200 = vperm.xlu0 %199, %v76
  %v201 = vpop.permute.xlu0 %200
  %204 = vset.pattern.permute.xlu0 0
  %205 = vperm.xlu0 %204, %v77
  %v206 = vpop.permute.xlu0 %205
  %209 = vset.pattern.permute.xlu0 0
  %210 = vperm.xlu0 %209, %v78
  %v211 = vpop.permute.xlu0 %210
  %214 = vset.pattern.permute.xlu0 0
  %215 = vperm.xlu0 %214, %v79
  %v216 = vpop.permute.xlu0 %215
  %219 = vset.pattern.permute.xlu0 0
  %220 = vperm.xlu0 %219, %v80
  %v221 = vpop.permute.xlu0 %220
  %224 = vset.pattern.permute.xlu0 0
  %225 = vperm.xlu0 %224, %v81
  %v226 = vpop.permute.xlu0 %225
  %229 = vset.pattern.permute.xlu0 0
  %230 = vperm.xlu0 %229, %v82
  %v231 = vpop.permute.xlu0 %230
  %234 = vset.pattern.permute.xlu0 0
  %235 = vperm.xlu0 %234, %v83
  %v236 = vpop.permute.xlu0 %235
  %239 = vset.pattern.permute.xlu0 0
  %240 = vperm.xlu0 %239, %v84
  %v241 = vpop.permute.xlu0 %240
  %244 = vset.pattern.permute.xlu0 0
  %245 = vperm.xlu0 %244, %v85
  %v246 = vpop.permute.xlu0 %245
  %249 = vset.pattern.permute.xlu0 0
  %250 = vperm.xlu0 %249, %v86
  %v251 = vpop.permute.xlu0 %250
  %254 = vset.pattern.permute.xlu0 0
  %255 = vperm.xlu0 %254, %v87
  %v256 = vpop.permute.xlu0 %255
  %259 = vset.pattern.permute.xlu0 0
  %260 = vperm.xlu0 %259, %v88
  %v261 = vpop.permute.xlu0 %260
  %264 = vset.pattern.permute.xlu0 0
  %265 = vperm.xlu0 %264, %v89
  %v266 = vpop.permute.xlu0 %265
  %269 = vset.pattern.permute.xlu0 0
  %270 = vperm.xlu0 %269, %v90
  %v271 = vpop.permute.xlu0 %270
  %274 = vset.pattern.permute.xlu0 0
  %275 = vperm.xlu0 %274, %v91
  %v276 = vpop.permute.xlu0 %275
  %279 = vset.pattern.permute.xlu0 0
  %280 = vperm.xlu0 %279, %v92
  %v281 = vpop.permute.xlu0 %280
  %v283 = vmul.f32 %v17, %v96
  %v284 = vmul.f32 %v18, %v101
  %v285 = vmul.f32 %v19, %v106
  %v286 = vmul.f32 %v20, %v111
  %v287 = vmul.f32 %v21, %v116
  %v288 = vmul.f32 %v22, %v121
  %v289 = vmul.f32 %v23, %v126
  %v290 = vmul.f32 %v24, %v131
  %v291 = vmul.f32 %v25, %v136
  %v292 = vmul.f32 %v26, %v141
  %v293 = vmul.f32 %v27, %v146
  %v294 = vmul.f32 %v28, %v151
  %v295 = vmul.f32 %v29, %v156
  %v296 = vmul.f32 %v30, %v161
  %v297 = vmul.f32 %v31, %v166
  %v298 = vmul.f32 %v32, %v171
  %v299 = vmul.f32 %v33, %v176
  %v300 = vmul.f32 %v34, %v181
  %v301 = vmul.f32 %v35, %v186
  %v302 = vmul.f32 %v36, %v191
  %v303 = vmul.f32 %v37, %v196
  %v304 = vmul.f32 %v38, %v201
  %v305 = vmul.f32 %v39, %v206
  %v306 = vmul.f32 %v40, %v211
  %v307 = vmul.f32 %v41, %v216
  %v308 = vmul.f32 %v42, %v221
  %v309 = vmul.f32 %v43, %v226
  %v310 = vmul.f32 %v44, %v231
  %v311 = vmul.f32 %v45, %v236
  %v312 = vmul.f32 %v46, %v241
  %v313 = vmul.f32 %v47, %v246
  %v314 = vmul.f32 %v48, %v251
  %v315 = vmul.f32 %v49, %v256
  %v316 = vmul.f32 %v50, %v261
  %v317 = vmul.f32 %v51, %v266
  %v318 = vmul.f32 %v52, %v271
  %v319 = vmul.f32 %v53, %v276
  %v320 = vmul.f32 %v54, %v281
  %v321 = vld [vmem:[%s2] sm:$0xff]
  %v322 = vld [vmem:[%s2 + $0x8] sm:$0xff]
  %v323 = vld [vmem:[%s2 + $0x10] sm:$0xff]
  %v324 = vld [vmem:[%s2 + $0x18] sm:$0xff]
  %v325 = vld [vmem:[%s3] sm:$0x1]
  %v327 = vlaneseq
  %v328 = vshrl.u32 %v327, 7
  %v329 = vsub.s32 0, %v328
  %v330 = vrot.slane %v325, %v329
  %vm332 = vcmask 261120
  %v334 = vsel %vm332, %v283, 0
  %v337 = vsel %vm332, %v284, 0
  %v340 = vsel %vm332, %v285, 0
  %v343 = vsel %vm332, %v286, 0
  %v346 = vsel %vm332, %v287, 0
  %v349 = vsel %vm332, %v288, 0
  %v352 = vsel %vm332, %v289, 0
  %v355 = vsel %vm332, %v290, 0
  %v358 = vsel %vm332, %v291, 0
  %v361 = vsel %vm332, %v292, 0
  %v364 = vsel %vm332, %v293, 0
  %v367 = vsel %vm332, %v294, 0
  %v370 = vsel %vm332, %v295, 0
  %v373 = vsel %vm332, %v296, 0
  %v376 = vsel %vm332, %v297, 0
  %v379 = vsel %vm332, %v298, 0
  %v382 = vsel %vm332, %v299, 0
  %v385 = vsel %vm332, %v300, 0
  %v388 = vsel %vm332, %v301, 0
  %v391 = vsel %vm332, %v302, 0
  %v394 = vsel %vm332, %v303, 0
  %v397 = vsel %vm332, %v304, 0
  %v400 = vsel %vm332, %v305, 0
  %v403 = vsel %vm332, %v306, 0
  %v406 = vsel %vm332, %v307, 0
  %v409 = vsel %vm332, %v308, 0
  %v412 = vsel %vm332, %v309, 0
  %v415 = vsel %vm332, %v310, 0
  %v418 = vsel %vm332, %v311, 0
  %v421 = vsel %vm332, %v312, 0
  %v424 = vsel %vm332, %v313, 0
  %v427 = vsel %vm332, %v314, 0
  %v430 = vsel %vm332, %v315, 0
  %v433 = vsel %vm332, %v316, 0
  %v436 = vsel %vm332, %v317, 0
  %v439 = vsel %vm332, %v318, 0
  %v442 = vsel %vm332, %v319, 0
  %v445 = vsel %vm332, %v320, 0
  %447 = vmatprep.subr.mxu0 0.0
  %448 = vmatpush1.msra.mxu0 0.0
  %449 = vmatprep.subr.mxu0 0.0
  %450 = vmatpush1.msra.mxu0 0.0
  %451 = vmatprep.subr.mxu0 0.0
  %452 = vmatpush1.msra.mxu0 0.0
  %453 = vmatprep.subr.mxu0 0.0
  %454 = vmatpush1.msra.mxu0 0.0
  %455 = vmatprep.subr.mxu0 0.0
  %456 = vmatpush1.msra.mxu0 0.0
  %457 = vmatprep.subr.mxu0 0.0
  %458 = vmatpush1.msra.mxu0 0.0
  %459 = vmatprep.subr.mxu0 0.0
  %460 = vmatpush1.msra.mxu0 0.0
  %461 = vmatprep.subr.mxu0 0.0
  %462 = vmatpush1.msra.mxu0 0.0
  %463 = vmatprep.subr.mxu0 0.0
  %464 = vmatpush1.msra.mxu0 0.0
  %465 = vmatprep.subr.mxu0 0.0
  %466 = vmatpush1.msra.mxu0 0.0
  %467 = vmatprep.subr.mxu0 0.0
  %468 = vmatpush1.msra.mxu0 0.0
  %469 = vmatprep.subr.mxu0 0.0
  %470 = vmatpush1.msra.mxu0 0.0
  %471 = vmatprep.subr.mxu0 0.0
  %472 = vmatpush1.msra.mxu0 %v324
  %473 = vmatprep.subr.mxu0 0.0
  %474 = vmatpush1.msra.mxu0 %v323
  %475 = vmatprep.subr.mxu0 0.0
  %476 = vmatpush1.msra.mxu0 %v322
  %477 = vmatprep.subr.mxu0 0.0
  %478 = vmatpush1.msra.mxu0 %v321
  %479 = vmatprep.subr.mxu0 0.0
  %480 = vmatpush2.msra.mxu0 0.0
  %481 = vmatprep.subr.mxu0 0.0
  %482 = vmatpush2.msra.mxu0 0.0
  %483 = vmatprep.subr.mxu0 0.0
  %484 = vmatpush2.msra.mxu0 0.0
  %485 = vmatprep.subr.mxu0 0.0
  %486 = vmatpush2.msra.mxu0 0.0
  %487 = vmatprep.subr.mxu0 0.0
  %488 = vmatpush2.msra.mxu0 0.0
  %489 = vmatprep.subr.mxu0 0.0
  %490 = vmatpush2.msra.mxu0 0.0
  %491 = vmatprep.subr.mxu0 0.0
  %492 = vmatpush2.msra.mxu0 0.0
  %493 = vmatprep.subr.mxu0 0.0
  %494 = vmatpush2.msra.mxu0 0.0
  %495 = vmatprep.subr.mxu0 0.0
  %496 = vmatpush2.msra.mxu0 0.0
  %497 = vmatprep.subr.mxu0 0.0
  %498 = vmatpush2.msra.mxu0 0.0
  %499 = vmatprep.subr.mxu0 0.0
  %500 = vmatpush2.msra.mxu0 0.0
  %501 = vmatprep.subr.mxu0 0.0
  %502 = vmatpush2.msra.mxu0 0.0
  %503 = vmatprep.subr.mxu0 0.0
  %504 = vmatpush2.msra.mxu0 0.0
  %505 = vmatprep.subr.mxu0 0.0
  %506 = vmatpush2.msra.mxu0 0.0
  %507 = vmatprep.subr.mxu0 0.0
  %508 = vmatpush2.msra.mxu0 0.0
  %509 = vmatprep.subr.mxu0 0.0
  %510 = vmatpush2.msra.mxu0 0.0
  %511 = vmatprep.mubr.f32.mxu0 0.0
  %512 = vmatmul.mubr.f32.gmra.mxu0 %v334
  %v513 = vpop.f32.mrf.mxu0
  %v514 = vadd.f32 %v330, %v513
  %v515 = vpop.f32.mrf.mxu0
  %516 = vmatprep.mubr.f32.mxu0 0.0
  %517 = vmatmul.mubr.f32.gmra.mxu0 %v337
  %v518 = vpop.f32.mrf.mxu0
  %v519 = vadd.f32 %v330, %v518
  %v520 = vpop.f32.mrf.mxu0
  %521 = vmatprep.mubr.f32.mxu0 0.0
  %522 = vmatmul.mubr.f32.gmra.mxu0 %v340
  %v523 = vpop.f32.mrf.mxu0
  %v524 = vadd.f32 %v330, %v523
  %v525 = vpop.f32.mrf.mxu0
  %526 = vmatprep.mubr.f32.mxu0 0.0
  %527 = vmatmul.mubr.f32.gmra.mxu0 %v343
  %v528 = vpop.f32.mrf.mxu0
  %v529 = vadd.f32 %v330, %v528
  %v530 = vpop.f32.mrf.mxu0
  %531 = vmatprep.mubr.f32.mxu0 0.0
  %532 = vmatmul.mubr.f32.gmra.mxu0 %v346
  %v533 = vpop.f32.mrf.mxu0
  %v534 = vadd.f32 %v330, %v533
  %v535 = vpop.f32.mrf.mxu0
  %536 = vmatprep.mubr.f32.mxu0 0.0
  %537 = vmatmul.mubr.f32.gmra.mxu0 %v349
  %v538 = vpop.f32.mrf.mxu0
  %v539 = vadd.f32 %v330, %v538
  %v540 = vpop.f32.mrf.mxu0
  %541 = vmatprep.mubr.f32.mxu0 0.0
  %542 = vmatmul.mubr.f32.gmra.mxu0 %v352
  %v543 = vpop.f32.mrf.mxu0
  %v544 = vadd.f32 %v330, %v543
  %v545 = vpop.f32.mrf.mxu0
  %546 = vmatprep.mubr.f32.mxu0 0.0
  %547 = vmatmul.mubr.f32.gmra.mxu0 %v355
  %v548 = vpop.f32.mrf.mxu0
  %v549 = vadd.f32 %v330, %v548
  %v550 = vpop.f32.mrf.mxu0
  %551 = vmatprep.mubr.f32.mxu0 0.0
  %552 = vmatmul.mubr.f32.gmra.mxu0 %v358
  %v553 = vpop.f32.mrf.mxu0
  %v554 = vadd.f32 %v330, %v553
  %v555 = vpop.f32.mrf.mxu0
  %556 = vmatprep.mubr.f32.mxu0 0.0
  %557 = vmatmul.mubr.f32.gmra.mxu0 %v361
  %v558 = vpop.f32.mrf.mxu0
  %v559 = vadd.f32 %v330, %v558
  %v560 = vpop.f32.mrf.mxu0
  %561 = vmatprep.mubr.f32.mxu0 0.0
  %562 = vmatmul.mubr.f32.gmra.mxu0 %v364
  %v563 = vpop.f32.mrf.mxu0
  %v564 = vadd.f32 %v330, %v563
  %v565 = vpop.f32.mrf.mxu0
  %566 = vmatprep.mubr.f32.mxu0 0.0
  %567 = vmatmul.mubr.f32.gmra.mxu0 %v367
  %v568 = vpop.f32.mrf.mxu0
  %v569 = vadd.f32 %v330, %v568
  %v570 = vpop.f32.mrf.mxu0
  %571 = vmatprep.mubr.f32.mxu0 0.0
  %572 = vmatmul.mubr.f32.gmra.mxu0 %v370
  %v573 = vpop.f32.mrf.mxu0
  %v574 = vadd.f32 %v330, %v573
  %v575 = vpop.f32.mrf.mxu0
  %576 = vmatprep.mubr.f32.mxu0 0.0
  %577 = vmatmul.mubr.f32.gmra.mxu0 %v373
  %v578 = vpop.f32.mrf.mxu0
  %v579 = vadd.f32 %v330, %v578
  %v580 = vpop.f32.mrf.mxu0
  %581 = vmatprep.mubr.f32.mxu0 0.0
  %582 = vmatmul.mubr.f32.gmra.mxu0 %v376
  %v583 = vpop.f32.mrf.mxu0
  %v584 = vadd.f32 %v330, %v583
  %v585 = vpop.f32.mrf.mxu0
  %586 = vmatprep.mubr.f32.mxu0 0.0
  %587 = vmatmul.mubr.f32.gmra.mxu0 %v379
  %v588 = vpop.f32.mrf.mxu0
  %v589 = vadd.f32 %v330, %v588
  %v590 = vpop.f32.mrf.mxu0
  %591 = vmatprep.mubr.f32.mxu0 0.0
  %592 = vmatmul.mubr.f32.gmra.mxu0 %v382
  %v593 = vpop.f32.mrf.mxu0
  %v594 = vadd.f32 %v330, %v593
  %v595 = vpop.f32.mrf.mxu0
  %596 = vmatprep.mubr.f32.mxu0 0.0
  %597 = vmatmul.mubr.f32.gmra.mxu0 %v385
  %v598 = vpop.f32.mrf.mxu0
  %v599 = vadd.f32 %v330, %v598
  %v600 = vpop.f32.mrf.mxu0
  %601 = vmatprep.mubr.f32.mxu0 0.0
  %602 = vmatmul.mubr.f32.gmra.mxu0 %v388
  %v603 = vpop.f32.mrf.mxu0
  %v604 = vadd.f32 %v330, %v603
  %v605 = vpop.f32.mrf.mxu0
  %606 = vmatprep.mubr.f32.mxu0 0.0
  %607 = vmatmul.mubr.f32.gmra.mxu0 %v391
  %v608 = vpop.f32.mrf.mxu0
  %v609 = vadd.f32 %v330, %v608
  %v610 = vpop.f32.mrf.mxu0
  %611 = vmatprep.mubr.f32.mxu0 0.0
  %612 = vmatmul.mubr.f32.gmra.mxu0 %v394
  %v613 = vpop.f32.mrf.mxu0
  %v614 = vadd.f32 %v330, %v613
  %v615 = vpop.f32.mrf.mxu0
  %616 = vmatprep.mubr.f32.mxu0 0.0
  %617 = vmatmul.mubr.f32.gmra.mxu0 %v397
  %v618 = vpop.f32.mrf.mxu0
  %v619 = vadd.f32 %v330, %v618
  %v620 = vpop.f32.mrf.mxu0
  %621 = vmatprep.mubr.f32.mxu0 0.0
  %622 = vmatmul.mubr.f32.gmra.mxu0 %v400
  %v623 = vpop.f32.mrf.mxu0
  %v624 = vadd.f32 %v330, %v623
  %v625 = vpop.f32.mrf.mxu0
  %626 = vmatprep.mubr.f32.mxu0 0.0
  %627 = vmatmul.mubr.f32.gmra.mxu0 %v403
  %v628 = vpop.f32.mrf.mxu0
  %v629 = vadd.f32 %v330, %v628
  %v630 = vpop.f32.mrf.mxu0
  %631 = vmatprep.mubr.f32.mxu0 0.0
  %632 = vmatmul.mubr.f32.gmra.mxu0 %v406
  %v633 = vpop.f32.mrf.mxu0
  %v634 = vadd.f32 %v330, %v633
  %v635 = vpop.f32.mrf.mxu0
  %636 = vmatprep.mubr.f32.mxu0 0.0
  %637 = vmatmul.mubr.f32.gmra.mxu0 %v409
  %v638 = vpop.f32.mrf.mxu0
  %v639 = vadd.f32 %v330, %v638
  %v640 = vpop.f32.mrf.mxu0
  %641 = vmatprep.mubr.f32.mxu0 0.0
  %642 = vmatmul.mubr.f32.gmra.mxu0 %v412
  %v643 = vpop.f32.mrf.mxu0
  %v644 = vadd.f32 %v330, %v643
  %v645 = vpop.f32.mrf.mxu0
  %646 = vmatprep.mubr.f32.mxu0 0.0
  %647 = vmatmul.mubr.f32.gmra.mxu0 %v415
  %v648 = vpop.f32.mrf.mxu0
  %v649 = vadd.f32 %v330, %v648
  %v650 = vpop.f32.mrf.mxu0
  %651 = vmatprep.mubr.f32.mxu0 0.0
  %652 = vmatmul.mubr.f32.gmra.mxu0 %v418
  %v653 = vpop.f32.mrf.mxu0
  %v654 = vadd.f32 %v330, %v653
  %v655 = vpop.f32.mrf.mxu0
  %656 = vmatprep.mubr.f32.mxu0 0.0
  %657 = vmatmul.mubr.f32.gmra.mxu0 %v421
  %v658 = vpop.f32.mrf.mxu0
  %v659 = vadd.f32 %v330, %v658
  %v660 = vpop.f32.mrf.mxu0
  %661 = vmatprep.mubr.f32.mxu0 0.0
  %662 = vmatmul.mubr.f32.gmra.mxu0 %v424
  %v663 = vpop.f32.mrf.mxu0
  %v664 = vadd.f32 %v330, %v663
  %v665 = vpop.f32.mrf.mxu0
  %666 = vmatprep.mubr.f32.mxu0 0.0
  %667 = vmatmul.mubr.f32.gmra.mxu0 %v427
  %v668 = vpop.f32.mrf.mxu0
  %v669 = vadd.f32 %v330, %v668
  %v670 = vpop.f32.mrf.mxu0
  %671 = vmatprep.mubr.f32.mxu0 0.0
  %672 = vmatmul.mubr.f32.gmra.mxu0 %v430
  %v673 = vpop.f32.mrf.mxu0
  %v674 = vadd.f32 %v330, %v673
  %v675 = vpop.f32.mrf.mxu0
  %676 = vmatprep.mubr.f32.mxu0 0.0
  %677 = vmatmul.mubr.f32.gmra.mxu0 %v433
  %v678 = vpop.f32.mrf.mxu0
  %v679 = vadd.f32 %v330, %v678
  %v680 = vpop.f32.mrf.mxu0
  %681 = vmatprep.mubr.f32.mxu0 0.0
  %682 = vmatmul.mubr.f32.gmra.mxu0 %v436
  %v683 = vpop.f32.mrf.mxu0
  %v684 = vadd.f32 %v330, %v683
  %v685 = vpop.f32.mrf.mxu0
  %686 = vmatprep.mubr.f32.mxu0 0.0
  %687 = vmatmul.mubr.f32.gmra.mxu0 %v439
  %v688 = vpop.f32.mrf.mxu0
  %v689 = vadd.f32 %v330, %v688
  %v690 = vpop.f32.mrf.mxu0
  %691 = vmatprep.mubr.f32.mxu0 0.0
  %692 = vmatmul.mubr.f32.gmra.mxu0 %v442
  %v693 = vpop.f32.mrf.mxu0
  %v694 = vadd.f32 %v330, %v693
  %v695 = vpop.f32.mrf.mxu0
  %696 = vmatprep.mubr.f32.mxu0 0.0
  %697 = vmatmul.mubr.f32.gmra.mxu0 %v445
  %v698 = vpop.f32.mrf.mxu0
  %v699 = vadd.f32 %v330, %v698
  %v700 = vpop.f32.mrf.mxu0
  %701 = vdwg.mxu0
  %v702 = vmax.f32 %v514, 0.0
  %v703 = vmax.f32 %v519, 0.0
  %v704 = vmax.f32 %v524, 0.0
  %v705 = vmax.f32 %v529, 0.0
  %v706 = vmax.f32 %v534, 0.0
  %v707 = vmax.f32 %v539, 0.0
  %v708 = vmax.f32 %v544, 0.0
  %v709 = vmax.f32 %v549, 0.0
  %v710 = vmax.f32 %v554, 0.0
  %v711 = vmax.f32 %v559, 0.0
  %v712 = vmax.f32 %v564, 0.0
  %v713 = vmax.f32 %v569, 0.0
  %v714 = vmax.f32 %v574, 0.0
  %v715 = vmax.f32 %v579, 0.0
  %v716 = vmax.f32 %v584, 0.0
  %v717 = vmax.f32 %v589, 0.0
  %v718 = vmax.f32 %v594, 0.0
  %v719 = vmax.f32 %v599, 0.0
  %v720 = vmax.f32 %v604, 0.0
  %v721 = vmax.f32 %v609, 0.0
  %v722 = vmax.f32 %v614, 0.0
  %v723 = vmax.f32 %v619, 0.0
  %v724 = vmax.f32 %v624, 0.0
  %v725 = vmax.f32 %v629, 0.0
  %v726 = vmax.f32 %v634, 0.0
  %v727 = vmax.f32 %v639, 0.0
  %v728 = vmax.f32 %v644, 0.0
  %v729 = vmax.f32 %v649, 0.0
  %v730 = vmax.f32 %v654, 0.0
  %v731 = vmax.f32 %v659, 0.0
  %v732 = vmax.f32 %v664, 0.0
  %v733 = vmax.f32 %v669, 0.0
  %v734 = vmax.f32 %v674, 0.0
  %v735 = vmax.f32 %v679, 0.0
  %v736 = vmax.f32 %v684, 0.0
  %v737 = vmax.f32 %v689, 0.0
  %v738 = vmax.f32 %v694, 0.0
  %v739 = vmax.f32 %v699, 0.0
  %vm740 = vcmask 523264
  %741 = vst.msk [vmem:[%s4] sm:$0xff] %vm740, %v702
  %742 = vst.msk [vmem:[%s4 + $0x8] sm:$0xff] %vm740, %v703
  %743 = vst.msk [vmem:[%s4 + $0x10] sm:$0xff] %vm740, %v704
  %744 = vst.msk [vmem:[%s4 + $0x18] sm:$0xff] %vm740, %v705
  %745 = vst.msk [vmem:[%s4 + $0x20] sm:$0xff] %vm740, %v706
  %746 = vst.msk [vmem:[%s4 + $0x28] sm:$0xff] %vm740, %v707
  %747 = vst.msk [vmem:[%s4 + $0x30] sm:$0xff] %vm740, %v708
  %748 = vst.msk [vmem:[%s4 + $0x38] sm:$0xff] %vm740, %v709
  %749 = vst.msk [vmem:[%s4 + $0x40] sm:$0xff] %vm740, %v710
  %750 = vst.msk [vmem:[%s4 + $0x48] sm:$0xff] %vm740, %v711
  %751 = vst.msk [vmem:[%s4 + $0x50] sm:$0xff] %vm740, %v712
  %752 = vst.msk [vmem:[%s4 + $0x58] sm:$0xff] %vm740, %v713
  %753 = vst.msk [vmem:[%s4 + $0x60] sm:$0xff] %vm740, %v714
  %754 = vst.msk [vmem:[%s4 + $0x68] sm:$0xff] %vm740, %v715
  %755 = vst.msk [vmem:[%s4 + $0x70] sm:$0xff] %vm740, %v716
  %756 = vst.msk [vmem:[%s4 + $0x78] sm:$0xff] %vm740, %v717
  %757 = vst.msk [vmem:[%s4 + $0x80] sm:$0xff] %vm740, %v718
  %758 = vst.msk [vmem:[%s4 + $0x88] sm:$0xff] %vm740, %v719
  %759 = vst.msk [vmem:[%s4 + $0x90] sm:$0xff] %vm740, %v720
  %760 = vst.msk [vmem:[%s4 + $0x98] sm:$0xff] %vm740, %v721
  %761 = vst.msk [vmem:[%s4 + $0xa0] sm:$0xff] %vm740, %v722
  %762 = vst.msk [vmem:[%s4 + $0xa8] sm:$0xff] %vm740, %v723
  %763 = vst.msk [vmem:[%s4 + $0xb0] sm:$0xff] %vm740, %v724
  %764 = vst.msk [vmem:[%s4 + $0xb8] sm:$0xff] %vm740, %v725
  %765 = vst.msk [vmem:[%s4 + $0xc0] sm:$0xff] %vm740, %v726
  %766 = vst.msk [vmem:[%s4 + $0xc8] sm:$0xff] %vm740, %v727
  %767 = vst.msk [vmem:[%s4 + $0xd0] sm:$0xff] %vm740, %v728
  %768 = vst.msk [vmem:[%s4 + $0xd8] sm:$0xff] %vm740, %v729
  %769 = vst.msk [vmem:[%s4 + $0xe0] sm:$0xff] %vm740, %v730
  %770 = vst.msk [vmem:[%s4 + $0xe8] sm:$0xff] %vm740, %v731
  %771 = vst.msk [vmem:[%s4 + $0xf0] sm:$0xff] %vm740, %v732
  %772 = vst.msk [vmem:[%s4 + $0xf8] sm:$0xff] %vm740, %v733
  %773 = vst.msk [vmem:[%s4 + $0x100] sm:$0xff] %vm740, %v734
  %774 = vst.msk [vmem:[%s4 + $0x108] sm:$0xff] %vm740, %v735
  %775 = vst.msk [vmem:[%s4 + $0x110] sm:$0xff] %vm740, %v736
  %776 = vst.msk [vmem:[%s4 + $0x118] sm:$0xff] %vm740, %v737
  %777 = vst.msk [vmem:[%s4 + $0x120] sm:$0xff] %vm740, %v738
  %778 = vst.msk [vmem:[%s4 + $0x128] sm:$0xff] %vm740, %v739
  // Predicated region
  $region18: #{tpu_custom_call.1} parent=0 // pred_check
    _
  $region19: #{tpu_custom_call.1} parent=0 // pred_check_branch
    %780 = sbr.rel (0) target = $region21
  $region20: #{tpu_custom_call.1} parent=0 // pred_region
    _
  $region21: #{tpu_custom_call.1} parent=0 // pred_fallthru
    _
  // Predicated region
  $region22: #{tpu_custom_call.1} parent=0 // pred_check
    _
  $region23: #{tpu_custom_call.1} parent=0 // pred_check_branch
    %782 = sbr.rel (0) target = $region25
  $region24: #{tpu_custom_call.1} parent=0 // pred_region
    _
  $region25: #{tpu_custom_call.1} parent=0 // pred_fallthru
    _

</llo_original>
